<compile_context>
chip_gen: v7x
topology: tpu7x:2x2x1
jax: 0.10.0
libtpu: 0.0.40
codegen_flags: <defaults>
</compile_context>

<pallas_src>
import math
import functools

import jax
import jax.numpy as jnp
from jax.experimental import pallas as pl
from jax.experimental.pallas import tpu as pltpu

LN_EPS = 1e-6
NEG_INF = -1e9


def _layer_norm(x, gamma, beta):
    # BERT-pytorch LayerNorm: gamma * (x - mean) / (std + eps) + beta, std with ddof=1.
    d = x.shape[-1]
    mean = jnp.mean(x, axis=-1, keepdims=True)
    centered = x - mean                                   # computed once, reused
    var = jnp.sum(centered * centered, axis=-1, keepdims=True) * (1.0 / (d - 1))
    inv = pl.reciprocal(jnp.sqrt(var) + LN_EPS, approx=True)   # EUP, keeps (std+eps) form
    return gamma * (centered * inv) + beta


def _gelu(x):
    # GELU (tanh approximation) as used in BERT.
    return 0.5 * x * (1.0 + jnp.tanh(
        math.sqrt(2.0 / math.pi) * (x + 0.044715 * (x ** 3))))


def transformer_block_kernel(num_heads, tq,
                             x_ref, mask_ref,
                             wq_ref, bq_ref, wk_ref, bk_ref, wv_ref, bv_ref,
                             wo_ref, bo_ref,
                             g1_ref, be1_ref, g2_ref, be2_ref,
                             wff1_ref, bff1_ref, wff2_ref, bff2_ref,
                             out_ref, attn_ref):
    """One grid step = one (batch, query-block) tile."""
    x_full = x_ref[0]                                  # (S, D) f32 (keys/values need all rows)
    S = x_full.shape[0]
    D = x_full.shape[1]
    H = num_heads
    dk = D // H
    scale = 1.0 / math.sqrt(dk)

    x_bf = x_full.astype(jnp.bfloat16)
    if tq == S:                                        # static branch (trace time)
        xq_bf = x_bf
    else:
        q_start = pl.multiple_of(pl.program_id(1) * tq, tq)
        xq_bf = x_ref[0, pl.ds(q_start, tq), :].astype(jnp.bfloat16)

    # ---- Q/K/V projections: bf16 operands, f32 accumulation, f32 bias add ----
    q = jnp.dot(xq_bf, wq_ref[...], preferred_element_type=jnp.float32) + bq_ref[...]
    k = jnp.dot(x_bf,  wk_ref[...], preferred_element_type=jnp.float32) + bk_ref[...]
    v = jnp.dot(x_bf,  wv_ref[...], preferred_element_type=jnp.float32) + bv_ref[...]

    # head-major (H, ., dk) bf16 tensors for batched MXU einsums
    q16 = q.astype(jnp.bfloat16)
    k16 = k.astype(jnp.bfloat16)
    v16 = v.astype(jnp.bfloat16)
    qh = jnp.stack([q16[:, h * dk:(h + 1) * dk] for h in range(H)], axis=0)   # (H, TQ, dk)
    kh = jnp.stack([k16[:, h * dk:(h + 1) * dk] for h in range(H)], axis=0)   # (H, S,  dk)
    vh = jnp.stack([v16[:, h * dk:(h + 1) * dk] for h in range(H)], axis=0)   # (H, S,  dk)

    # additive mask computed once (not per head)
    mask = mask_ref[0, 0]                               # (TQ, S)
    mask_add = jnp.where(mask == 0, NEG_INF, 0.0).astype(jnp.float32)

    # ---- batched scaled dot-product attention (f32 softmax) ----
    scores = jnp.einsum('hqd,hkd->hqk', qh, kh,
                        preferred_element_type=jnp.float32)                   # (H, TQ, S)
    scores = scores * scale + mask_add[None, :, :]
    m = jnp.max(scores, axis=-1, keepdims=True)
    p = jnp.exp(scores - m)
    denom = jnp.sum(p, axis=-1, keepdims=True)
    p = p * pl.reciprocal(denom, approx=True)           # softmax probs, f32
    attn_ref[0] = p.astype(attn_ref.dtype)              # one contiguous (H, TQ, S) store

    ctx_h = jnp.einsum('hqk,hkd->hqd', p.astype(jnp.bfloat16), vh,
                       preferred_element_type=jnp.float32)                    # (H, TQ, dk)
    ctx = jnp.concatenate([ctx_h[h] for h in range(H)], axis=-1)              # (TQ, D)

    a = jnp.dot(ctx.astype(jnp.bfloat16), wo_ref[...],
                preferred_element_type=jnp.float32) + bo_ref[...]

    # ---- input_sublayer: x + dropout(norm(x)) (identity sublayer, eval dropout) ----
    x1 = a + _layer_norm(a, g1_ref[...], be1_ref[...])

    # ---- output_sublayer: x1 + dropout(FFN(norm(x1))) ----
    n2 = _layer_norm(x1, g2_ref[...], be2_ref[...])
    h1 = jnp.dot(n2.astype(jnp.bfloat16), wff1_ref[...],
                 preferred_element_type=jnp.float32) + bff1_ref[...]
    h1 = _gelu(h1)
    ff = jnp.dot(h1.astype(jnp.bfloat16), wff2_ref[...],
                 preferred_element_type=jnp.float32) + bff2_ref[...]
    x2 = x1 + ff

    # final dropout = identity (eval mode)
    out_ref[0] = x2.astype(out_ref.dtype)


def transformer_block(x, mask, params, num_heads, *, q_block=None):
    """params: dict of weights (see init_params, f32). Returns (out, attns)."""
    B, S, D = x.shape
    H = num_heads
    assert D % H == 0

    # query-row tiling (VMEM control on v7x at real sizes; degenerates to one block here)
    if q_block is None:
        q_block = S if S <= 256 else 256
    if S % q_block != 0 or q_block % 8 != 0:
        q_block = S
    nq = S // q_block

    weight_names = {"wq", "wk", "wv", "wo", "wff1", "wff2"}
    param_order = ["wq", "bq", "wk", "bk", "wv", "bv", "wo", "bo",
                   "g1", "be1", "g2", "be2", "wff1", "bff1", "wff2", "bff2"]
    # weights in bf16 (half the HBM->VMEM DMA, bf16 MXU inputs); biases/gamma/beta in f32
    param_list = [params[n].astype(jnp.bfloat16) if n in weight_names
                  else params[n].astype(jnp.float32)
                  for n in param_order]

    def _const_spec(p):
        nd = p.ndim
        return pl.BlockSpec(p.shape, lambda b, qb, _nd=nd: (0,) * _nd)

    in_specs = [
        pl.BlockSpec((1, S, D), lambda b, qb: (b, 0, 0)),            # x (full S for K/V)
        pl.BlockSpec((1, 1, q_block, S), lambda b, qb: (b, 0, qb, 0)),  # mask rows for this q block
    ] + [_const_spec(p) for p in param_list]

    out_specs = (
        pl.BlockSpec((1, q_block, D), lambda b, qb: (b, qb, 0)),        # output
        pl.BlockSpec((1, H, q_block, S), lambda b, qb: (b, 0, qb, 0)),  # attention maps
    )

    out_shape = (
        jax.ShapeDtypeStruct((B, S, D), jnp.float32),
        jax.ShapeDtypeStruct((B, H, S, S), jnp.float32),
    )

    kernel = functools.partial(transformer_block_kernel, H, q_block)

    fn = pl.pallas_call(
        kernel,
        out_shape=out_shape,
        grid_spec=pltpu.PrefetchScalarGridSpec(
            num_scalar_prefetch=0,
            grid=(B, nq),
            in_specs=in_specs,
            out_specs=out_specs,
        ),
        compiler_params=pltpu.CompilerParams(
            dimension_semantics=("parallel", "parallel"),
            vmem_limit_bytes=64 * 1024 * 1024,
        ),
    )
    return fn(x, mask, *param_list)


def reference_block(x, mask, params, num_heads):
    """Pure-JAX f32 reference with identical forward semantics."""
    B, S, D = x.shape
    H = num_heads
    dk = D // H

    def ln(t, g, b):
        mean = jnp.mean(t, axis=-1, keepdims=True)
        c = t - mean
        var = jnp.sum(c * c, axis=-1, keepdims=True) / (D - 1)
        return g * c / (jnp.sqrt(var) + LN_EPS) + b

    q = x @ params["wq"] + params["bq"]
    k = x @ params["wk"] + params["bk"]
    v = x @ params["wv"] + params["bv"]
    qh = q.reshape(B, S, H, dk).transpose(0, 2, 1, 3)
    kh = k.reshape(B, S, H, dk).transpose(0, 2, 1, 3)
    vh = v.reshape(B, S, H, dk).transpose(0, 2, 1, 3)
    scores = jnp.einsum('bhqd,bhkd->bhqk', qh, kh) / math.sqrt(dk)
    scores = jnp.where(mask == 0, NEG_INF, scores)
    p = jax.nn.softmax(scores, axis=-1)
    ctx = jnp.einsum('bhqk,bhkd->bhqd', p, vh).transpose(0, 2, 1, 3).reshape(B, S, D)
    a = ctx @ params["wo"] + params["bo"]
    x1 = a + ln(a, params["g1"], params["be1"])
    n2 = ln(x1, params["g2"], params["be2"])
    h1 = _gelu(n2 @ params["wff1"] + params["bff1"])
    ff = h1 @ params["wff2"] + params["bff2"]
    return x1 + ff, p


def init_params(key, d_model, num_heads, d_ff):
    """Deterministic synthetic parameters (shapes from the module __init__), f32."""
    keys = jax.random.split(key, 8)
    s = 0.02

    def lin(k, din, dout):
        return s * jax.random.normal(k, (din, dout), jnp.float32)

    params = {
        # MultiHeadedAttention: 4 x Linear(d_model, d_model)
        "wq": lin(keys[0], d_model, d_model), "bq": jnp.zeros((1, d_model), jnp.float32),
        "wk": lin(keys[1], d_model, d_model), "bk": jnp.zeros((1, d_model), jnp.float32),
        "wv": lin(keys[2], d_model, d_model), "bv": jnp.zeros((1, d_model), jnp.float32),
        "wo": lin(keys[3], d_model, d_model), "bo": jnp.zeros((1, d_model), jnp.float32),
        # SublayerConnection LayerNorms
        "g1": jnp.ones((1, d_model), jnp.float32), "be1": jnp.zeros((1, d_model), jnp.float32),
        "g2": jnp.ones((1, d_model), jnp.float32), "be2": jnp.zeros((1, d_model), jnp.float32),
        # PositionwiseFeedForward: Linear(d_model, d_ff), Linear(d_ff, d_model)
        "wff1": lin(keys[4], d_model, d_ff), "bff1": jnp.zeros((1, d_ff), jnp.float32),
        "wff2": lin(keys[5], d_ff, d_model), "bff2": jnp.zeros((1, d_model), jnp.float32),
    }
    return params


if __name__ == "__main__":
    B, S, D, H = 2, 8, 32, 4
    D_FF = 4 * D

    root = jax.random.PRNGKey(0)
    k_x, k_p = jax.random.split(root)

    x = jax.random.normal(k_x, (B, S, D), jnp.float32)

    # padding-style attention mask: batch 0 sees all 8 tokens, batch 1 sees 6
    lengths = jnp.array([8, 6], jnp.int32)
    col = jnp.arange(S)[None, None, None, :]                               # (1,1,1,S)
    mask = (col < lengths[:, None, None, None]).astype(jnp.float32)        # (B,1,1,S)
    mask = jnp.broadcast_to(mask, (B, 1, S, S)).astype(jnp.float32)        # (B,1,S,S)

    params = init_params(k_p, D, H, D_FF)

    out, attns = transformer_block(x, mask, params, num_heads=H)
    out = jax.block_until_ready(out)
    attns = jax.block_until_ready(attns)

    assert out.shape == (B, S, D)
    assert attns.shape == (B, H, S, S)
    assert bool(jnp.all(jnp.isfinite(out)))
    # softmax rows sum to 1 (approx reciprocal -> slightly loosened tolerance)
    assert bool(jnp.allclose(jnp.sum(attns, axis=-1), 1.0, atol=1e-2))

    # compare against the pure-JAX f32 reference (bf16 matmuls -> loose tolerance)
    ref_out, ref_attn = reference_block(x, mask, params, H)
    rel = float(jnp.linalg.norm(out - ref_out) / (jnp.linalg.norm(ref_out) + 1e-12))
    assert rel < 5e-2, f"output relative error too large: {rel}"
    assert float(jnp.max(jnp.abs(attns - ref_attn))) < 2e-2

    print("KERNEL_OK")
</pallas_src>

<mosaic_0001>
module attributes {stable_mosaic.version = 11 : i64} {
  func.func @transformer_block_kernel(%arg0: i32, %arg1: i32, %arg2: memref<1x8x32xf32, #tpu.memory_space<vmem>>, %arg3: memref<1x1x8x8xf32, #tpu.memory_space<vmem>>, %arg4: memref<32x32xbf16, #tpu.memory_space<vmem>>, %arg5: memref<1x32xf32, #tpu.memory_space<vmem>>, %arg6: memref<32x32xbf16, #tpu.memory_space<vmem>>, %arg7: memref<1x32xf32, #tpu.memory_space<vmem>>, %arg8: memref<32x32xbf16, #tpu.memory_space<vmem>>, %arg9: memref<1x32xf32, #tpu.memory_space<vmem>>, %arg10: memref<32x32xbf16, #tpu.memory_space<vmem>>, %arg11: memref<1x32xf32, #tpu.memory_space<vmem>>, %arg12: memref<1x32xf32, #tpu.memory_space<vmem>>, %arg13: memref<1x32xf32, #tpu.memory_space<vmem>>, %arg14: memref<1x32xf32, #tpu.memory_space<vmem>>, %arg15: memref<1x32xf32, #tpu.memory_space<vmem>>, %arg16: memref<32x128xbf16, #tpu.memory_space<vmem>>, %arg17: memref<1x128xf32, #tpu.memory_space<vmem>>, %arg18: memref<128x32xbf16, #tpu.memory_space<vmem>>, %arg19: memref<1x32xf32, #tpu.memory_space<vmem>>, %arg20: memref<1x8x32xf32, #tpu.memory_space<vmem>>, %arg21: memref<1x4x8x8xf32, #tpu.memory_space<vmem>>) attributes {dimension_semantics = [#tpu.dimension_semantics<parallel>, #tpu.dimension_semantics<parallel>], iteration_bounds = array<i64: 2, 1>, scalar_prefetch = 0 : i64, scratch_operands = 0 : i64, tpu.core_type = #tpu.core_type<tc>, window_params = [{transform_indices = @transform_0, window_bounds = array<i64: 1, 8, 32>}, {transform_indices = @transform_1, window_bounds = array<i64: 1, 1, 8, 8>}, {pipeline_mode = #tpu.pipeline_mode<synchronous>, transform_indices = @transform_2, window_bounds = array<i64: 32, 32>}, {pipeline_mode = #tpu.pipeline_mode<synchronous>, transform_indices = @transform_3, window_bounds = array<i64: 1, 32>}, {pipeline_mode = #tpu.pipeline_mode<synchronous>, transform_indices = @transform_4, window_bounds = array<i64: 32, 32>}, {pipeline_mode = #tpu.pipeline_mode<synchronous>, transform_indices = @transform_5, window_bounds = array<i64: 1, 32>}, {pipeline_mode = #tpu.pipeline_mode<synchronous>, transform_indices = @transform_6, window_bounds = array<i64: 32, 32>}, {pipeline_mode = #tpu.pipeline_mode<synchronous>, transform_indices = @transform_7, window_bounds = array<i64: 1, 32>}, {pipeline_mode = #tpu.pipeline_mode<synchronous>, transform_indices = @transform_8, window_bounds = array<i64: 32, 32>}, {pipeline_mode = #tpu.pipeline_mode<synchronous>, transform_indices = @transform_9, window_bounds = array<i64: 1, 32>}, {pipeline_mode = #tpu.pipeline_mode<synchronous>, transform_indices = @transform_10, window_bounds = array<i64: 1, 32>}, {pipeline_mode = #tpu.pipeline_mode<synchronous>, transform_indices = @transform_11, window_bounds = array<i64: 1, 32>}, {pipeline_mode = #tpu.pipeline_mode<synchronous>, transform_indices = @transform_12, window_bounds = array<i64: 1, 32>}, {pipeline_mode = #tpu.pipeline_mode<synchronous>, transform_indices = @transform_13, window_bounds = array<i64: 1, 32>}, {pipeline_mode = #tpu.pipeline_mode<synchronous>, transform_indices = @transform_14, window_bounds = array<i64: 32, 128>}, {pipeline_mode = #tpu.pipeline_mode<synchronous>, transform_indices = @transform_15, window_bounds = array<i64: 1, 128>}, {pipeline_mode = #tpu.pipeline_mode<synchronous>, transform_indices = @transform_16, window_bounds = array<i64: 128, 32>}, {pipeline_mode = #tpu.pipeline_mode<synchronous>, transform_indices = @transform_17, window_bounds = array<i64: 1, 32>}, {transform_indices = @transform_18, window_bounds = array<i64: 1, 8, 32>}, {transform_indices = @transform_19, window_bounds = array<i64: 1, 4, 8, 8>}]} {
    %c0 = arith.constant 0 : index
    %c0_0 = arith.constant 0 : index
    %c0_1 = arith.constant 0 : index
    %0 = vector.load %arg2[%c0, %c0_0, %c0_1] : memref<1x8x32xf32, #tpu.memory_space<vmem>>, vector<1x8x32xf32>
    %1 = vector.shape_cast %0 : vector<1x8x32xf32> to vector<8x32xf32>
    %2 = arith.truncf %1 : vector<8x32xf32> to vector<8x32xbf16>
    %c0_2 = arith.constant 0 : index
    %c0_3 = arith.constant 0 : index
    %3 = vector.load %arg4[%c0_2, %c0_3] : memref<32x32xbf16, #tpu.memory_space<vmem>>, vector<32x32xbf16>
    %cst = arith.constant dense<0.000000e+00> : vector<8x32xf32>
    %4 = tpu.matmul %2, %3, %cst {dimension_numbers = #tpu.dot_dimension_numbers<[1], [0], [0], [1], [0, 0, 1, 1], [], []>} : vector<8x32xbf16>, vector<32x32xbf16>, vector<8x32xf32> -> vector<8x32xf32>
    %c0_4 = arith.constant 0 : index
    %c0_5 = arith.constant 0 : index
    %5 = vector.load %arg5[%c0_4, %c0_5] : memref<1x32xf32, #tpu.memory_space<vmem>>, vector<1x32xf32>
    %6 = vector.broadcast %5 : vector<1x32xf32> to vector<8x32xf32>
    %7 = arith.addf %4, %6 : vector<8x32xf32>
    %c0_6 = arith.constant 0 : index
    %c0_7 = arith.constant 0 : index
    %8 = vector.load %arg6[%c0_6, %c0_7] : memref<32x32xbf16, #tpu.memory_space<vmem>>, vector<32x32xbf16>
    %cst_8 = arith.constant dense<0.000000e+00> : vector<8x32xf32>
    %9 = tpu.matmul %2, %8, %cst_8 {dimension_numbers = #tpu.dot_dimension_numbers<[1], [0], [0], [1], [0, 0, 1, 1], [], []>} : vector<8x32xbf16>, vector<32x32xbf16>, vector<8x32xf32> -> vector<8x32xf32>
    %c0_9 = arith.constant 0 : index
    %c0_10 = arith.constant 0 : index
    %10 = vector.load %arg7[%c0_9, %c0_10] : memref<1x32xf32, #tpu.memory_space<vmem>>, vector<1x32xf32>
    %11 = vector.broadcast %10 : vector<1x32xf32> to vector<8x32xf32>
    %12 = arith.addf %9, %11 : vector<8x32xf32>
    %c0_11 = arith.constant 0 : index
    %c0_12 = arith.constant 0 : index
    %13 = vector.load %arg8[%c0_11, %c0_12] : memref<32x32xbf16, #tpu.memory_space<vmem>>, vector<32x32xbf16>
    %cst_13 = arith.constant dense<0.000000e+00> : vector<8x32xf32>
    %14 = tpu.matmul %2, %13, %cst_13 {dimension_numbers = #tpu.dot_dimension_numbers<[1], [0], [0], [1], [0, 0, 1, 1], [], []>} : vector<8x32xbf16>, vector<32x32xbf16>, vector<8x32xf32> -> vector<8x32xf32>
    %c0_14 = arith.constant 0 : index
    %c0_15 = arith.constant 0 : index
    %15 = vector.load %arg9[%c0_14, %c0_15] : memref<1x32xf32, #tpu.memory_space<vmem>>, vector<1x32xf32>
    %16 = vector.broadcast %15 : vector<1x32xf32> to vector<8x32xf32>
    %17 = arith.addf %14, %16 : vector<8x32xf32>
    %18 = arith.truncf %7 : vector<8x32xf32> to vector<8x32xbf16>
    %19 = arith.truncf %12 : vector<8x32xf32> to vector<8x32xbf16>
    %20 = arith.truncf %17 : vector<8x32xf32> to vector<8x32xbf16>
    %21 = vector.extract_strided_slice %18 {offsets = [0, 0], sizes = [8, 8], strides = [1, 1]} : vector<8x32xbf16> to vector<8x8xbf16>
    %22 = vector.extract_strided_slice %18 {offsets = [0, 8], sizes = [8, 8], strides = [1, 1]} : vector<8x32xbf16> to vector<8x8xbf16>
    %23 = vector.extract_strided_slice %18 {offsets = [0, 16], sizes = [8, 8], strides = [1, 1]} : vector<8x32xbf16> to vector<8x8xbf16>
    %24 = vector.extract_strided_slice %18 {offsets = [0, 24], sizes = [8, 8], strides = [1, 1]} : vector<8x32xbf16> to vector<8x8xbf16>
    %25 = vector.shape_cast %21 : vector<8x8xbf16> to vector<1x8x8xbf16>
    %26 = vector.shape_cast %22 : vector<8x8xbf16> to vector<1x8x8xbf16>
    %27 = vector.shape_cast %23 : vector<8x8xbf16> to vector<1x8x8xbf16>
    %28 = vector.shape_cast %24 : vector<8x8xbf16> to vector<1x8x8xbf16>
    %29 = tpu.concatenate %25, %26, %27, %28 in 0 : vector<1x8x8xbf16>, vector<1x8x8xbf16>, vector<1x8x8xbf16>, vector<1x8x8xbf16> -> vector<4x8x8xbf16>
    %30 = vector.extract_strided_slice %19 {offsets = [0, 0], sizes = [8, 8], strides = [1, 1]} : vector<8x32xbf16> to vector<8x8xbf16>
    %31 = vector.extract_strided_slice %19 {offsets = [0, 8], sizes = [8, 8], strides = [1, 1]} : vector<8x32xbf16> to vector<8x8xbf16>
    %32 = vector.extract_strided_slice %19 {offsets = [0, 16], sizes = [8, 8], strides = [1, 1]} : vector<8x32xbf16> to vector<8x8xbf16>
    %33 = vector.extract_strided_slice %19 {offsets = [0, 24], sizes = [8, 8], strides = [1, 1]} : vector<8x32xbf16> to vector<8x8xbf16>
    %34 = vector.shape_cast %30 : vector<8x8xbf16> to vector<1x8x8xbf16>
    %35 = vector.shape_cast %31 : vector<8x8xbf16> to vector<1x8x8xbf16>
    %36 = vector.shape_cast %32 : vector<8x8xbf16> to vector<1x8x8xbf16>
    %37 = vector.shape_cast %33 : vector<8x8xbf16> to vector<1x8x8xbf16>
    %38 = tpu.concatenate %34, %35, %36, %37 in 0 : vector<1x8x8xbf16>, vector<1x8x8xbf16>, vector<1x8x8xbf16>, vector<1x8x8xbf16> -> vector<4x8x8xbf16>
    %39 = vector.extract_strided_slice %20 {offsets = [0, 0], sizes = [8, 8], strides = [1, 1]} : vector<8x32xbf16> to vector<8x8xbf16>
    %40 = vector.extract_strided_slice %20 {offsets = [0, 8], sizes = [8, 8], strides = [1, 1]} : vector<8x32xbf16> to vector<8x8xbf16>
    %41 = vector.extract_strided_slice %20 {offsets = [0, 16], sizes = [8, 8], strides = [1, 1]} : vector<8x32xbf16> to vector<8x8xbf16>
    %42 = vector.extract_strided_slice %20 {offsets = [0, 24], sizes = [8, 8], strides = [1, 1]} : vector<8x32xbf16> to vector<8x8xbf16>
    %43 = vector.shape_cast %39 : vector<8x8xbf16> to vector<1x8x8xbf16>
    %44 = vector.shape_cast %40 : vector<8x8xbf16> to vector<1x8x8xbf16>
    %45 = vector.shape_cast %41 : vector<8x8xbf16> to vector<1x8x8xbf16>
    %46 = vector.shape_cast %42 : vector<8x8xbf16> to vector<1x8x8xbf16>
    %47 = tpu.concatenate %43, %44, %45, %46 in 0 : vector<1x8x8xbf16>, vector<1x8x8xbf16>, vector<1x8x8xbf16>, vector<1x8x8xbf16> -> vector<4x8x8xbf16>
    %c0_16 = arith.constant 0 : index
    %c0_17 = arith.constant 0 : index
    %c0_18 = arith.constant 0 : index
    %c0_19 = arith.constant 0 : index
    %48 = vector.load %arg3[%c0_16, %c0_17, %c0_18, %c0_19] : memref<1x1x8x8xf32, #tpu.memory_space<vmem>>, vector<1x1x8x8xf32>
    %49 = vector.shape_cast %48 : vector<1x1x8x8xf32> to vector<8x8xf32>
    %cst_20 = arith.constant 0.000000e+00 : f32
    %50 = vector.broadcast %cst_20 : f32 to vector<8x8xf32>
    %51 = arith.cmpf oeq, %49, %50 : vector<8x8xf32>
    %cst_21 = arith.constant -1.000000e+09 : f32
    %cst_22 = arith.constant 0.000000e+00 : f32
    %52 = vector.broadcast %cst_21 : f32 to vector<8x8xf32>
    %53 = vector.broadcast %cst_22 : f32 to vector<8x8xf32>
    %54 = arith.select %51, %52, %53 : vector<8x8xi1>, vector<8x8xf32>
    "tpu.trace_start"() <{level = 10 : i32, message = "hqd,hkd->hqk"}> : () -> ()
    %cst_23 = arith.constant dense<0.000000e+00> : vector<4x8x8xf32>
    %55 = tpu.matmul %29, %38, %cst_23 {dimension_numbers = #tpu.dot_dimension_numbers<[2], [2], [1], [1], [0, 0, 0, 1, 1, 1], [0], [0]>} : vector<4x8x8xbf16>, vector<4x8x8xbf16>, vector<4x8x8xf32> -> vector<4x8x8xf32>
    "tpu.trace_stop"() : () -> ()
    %cst_24 = arith.constant 0.353553385 : f32
    %56 = vector.broadcast %cst_24 : f32 to vector<4x8x8xf32>
    %57 = arith.mulf %55, %56 : vector<4x8x8xf32>
    %58 = vector.shape_cast %54 : vector<8x8xf32> to vector<1x8x8xf32>
    %59 = vector.broadcast %58 : vector<1x8x8xf32> to vector<4x8x8xf32>
    %60 = arith.addf %57, %59 : vector<4x8x8xf32>
    %cst_25 = arith.constant dense<0xFF800000> : vector<4x8xf32>
    %61 = vector.multi_reduction <maximumf>, %60, %cst_25 [2] : vector<4x8x8xf32> to vector<4x8xf32>
    %62 = vector.shape_cast %61 : vector<4x8xf32> to vector<4x8x1xf32>
    %63 = vector.broadcast %62 : vector<4x8x1xf32> to vector<4x8x8xf32>
    %64 = arith.subf %60, %63 : vector<4x8x8xf32>
    %65 = math.exp %64 : vector<4x8x8xf32>
    %cst_26 = arith.constant dense<0.000000e+00> : vector<4x8xf32>
    %66 = vector.multi_reduction <add>, %65, %cst_26 [2] : vector<4x8x8xf32> to vector<4x8xf32>
    %67 = vector.shape_cast %66 : vector<4x8xf32> to vector<4x8x1xf32>
    %68 = tpu.reciprocal %67 {approx = true} : vector<4x8x1xf32> -> vector<4x8x1xf32>
    %69 = vector.broadcast %68 : vector<4x8x1xf32> to vector<4x8x8xf32>
    %70 = arith.mulf %65, %69 : vector<4x8x8xf32>
    %c0_27 = arith.constant 0 : index
    %c0_28 = arith.constant 0 : index
    %c0_29 = arith.constant 0 : index
    %c0_30 = arith.constant 0 : index
    %71 = vector.load %arg21[%c0_27, %c0_28, %c0_29, %c0_30] : memref<1x4x8x8xf32, #tpu.memory_space<vmem>>, vector<1x4x8x8xf32>
    %72 = vector.shape_cast %71 : vector<1x4x8x8xf32> to vector<4x8x8xf32>
    %73 = vector.shape_cast %70 : vector<4x8x8xf32> to vector<1x4x8x8xf32>
    tpu.vector_store %arg21[%c0_27, %c0_28, %c0_29, %c0_30], %73 {strides = array<i32>} : memref<1x4x8x8xf32, #tpu.memory_space<vmem>>, vector<1x4x8x8xf32>,
    %74 = arith.truncf %70 : vector<4x8x8xf32> to vector<4x8x8xbf16>
    "tpu.trace_start"() <{level = 10 : i32, message = "hqk,hkd->hqd"}> : () -> ()
    %cst_31 = arith.constant dense<0.000000e+00> : vector<4x8x8xf32>
    %75 = tpu.matmul %74, %47, %cst_31 {dimension_numbers = #tpu.dot_dimension_numbers<[2], [1], [1], [2], [0, 0, 0, 1, 1, 2], [0], [0]>} : vector<4x8x8xbf16>, vector<4x8x8xbf16>, vector<4x8x8xf32> -> vector<4x8x8xf32>
    "tpu.trace_stop"() : () -> ()
    %76 = vector.extract_strided_slice %75 {offsets = [0, 0, 0], sizes = [1, 8, 8], strides = [1, 1, 1]} : vector<4x8x8xf32> to vector<1x8x8xf32>
    %77 = vector.shape_cast %76 : vector<1x8x8xf32> to vector<8x8xf32>
    %78 = vector.extract_strided_slice %75 {offsets = [1, 0, 0], sizes = [1, 8, 8], strides = [1, 1, 1]} : vector<4x8x8xf32> to vector<1x8x8xf32>
    %79 = vector.shape_cast %78 : vector<1x8x8xf32> to vector<8x8xf32>
    %80 = vector.extract_strided_slice %75 {offsets = [2, 0, 0], sizes = [1, 8, 8], strides = [1, 1, 1]} : vector<4x8x8xf32> to vector<1x8x8xf32>
    %81 = vector.shape_cast %80 : vector<1x8x8xf32> to vector<8x8xf32>
    %82 = vector.extract_strided_slice %75 {offsets = [3, 0, 0], sizes = [1, 8, 8], strides = [1, 1, 1]} : vector<4x8x8xf32> to vector<1x8x8xf32>
    %83 = vector.shape_cast %82 : vector<1x8x8xf32> to vector<8x8xf32>
    %84 = tpu.concatenate %77, %79, %81, %83 in 1 : vector<8x8xf32>, vector<8x8xf32>, vector<8x8xf32>, vector<8x8xf32> -> vector<8x32xf32>
    %85 = arith.truncf %84 : vector<8x32xf32> to vector<8x32xbf16>
    %c0_32 = arith.constant 0 : index
    %c0_33 = arith.constant 0 : index
    %86 = vector.load %arg10[%c0_32, %c0_33] : memref<32x32xbf16, #tpu.memory_space<vmem>>, vector<32x32xbf16>
    %cst_34 = arith.constant dense<0.000000e+00> : vector<8x32xf32>
    %87 = tpu.matmul %85, %86, %cst_34 {dimension_numbers = #tpu.dot_dimension_numbers<[1], [0], [0], [1], [0, 0, 1, 1], [], []>} : vector<8x32xbf16>, vector<32x32xbf16>, vector<8x32xf32> -> vector<8x32xf32>
    %c0_35 = arith.constant 0 : index
    %c0_36 = arith.constant 0 : index
    %88 = vector.load %arg11[%c0_35, %c0_36] : memref<1x32xf32, #tpu.memory_space<vmem>>, vector<1x32xf32>
    %89 = vector.broadcast %88 : vector<1x32xf32> to vector<8x32xf32>
    %90 = arith.addf %87, %89 : vector<8x32xf32>
    %c0_37 = arith.constant 0 : index
    %c0_38 = arith.constant 0 : index
    %91 = vector.load %arg12[%c0_37, %c0_38] : memref<1x32xf32, #tpu.memory_space<vmem>>, vector<1x32xf32>
    %c0_39 = arith.constant 0 : index
    %c0_40 = arith.constant 0 : index
    %92 = vector.load %arg13[%c0_39, %c0_40] : memref<1x32xf32, #tpu.memory_space<vmem>>, vector<1x32xf32>
    %cst_41 = arith.constant dense<0.000000e+00> : vector<8xf32>
    %93 = vector.multi_reduction <add>, %90, %cst_41 [1] : vector<8x32xf32> to vector<8xf32>
    %94 = vector.shape_cast %93 : vector<8xf32> to vector<8x1xf32>
    %cst_42 = arith.constant 3.200000e+01 : f32
    %95 = vector.broadcast %cst_42 : f32 to vector<8x1xf32>
    %96 = arith.divf %94, %95 : vector<8x1xf32>
    %97 = vector.broadcast %96 : vector<8x1xf32> to vector<8x32xf32>
    %98 = arith.subf %90, %97 : vector<8x32xf32>
    %99 = arith.mulf %98, %98 : vector<8x32xf32>
    %cst_43 = arith.constant dense<0.000000e+00> : vector<8xf32>
    %100 = vector.multi_reduction <add>, %99, %cst_43 [1] : vector<8x32xf32> to vector<8xf32>
    %101 = vector.shape_cast %100 : vector<8xf32> to vector<8x1xf32>
    %cst_44 = arith.constant 0.0322580636 : f32
    %102 = vector.broadcast %cst_44 : f32 to vector<8x1xf32>
    %103 = arith.mulf %101, %102 : vector<8x1xf32>
    %104 = math.sqrt %103 : vector<8x1xf32>
    %cst_45 = arith.constant 9.99999997E-7 : f32
    %105 = vector.broadcast %cst_45 : f32 to vector<8x1xf32>
    %106 = arith.addf %104, %105 : vector<8x1xf32>
    %107 = tpu.reciprocal %106 {approx = true} : vector<8x1xf32> -> vector<8x1xf32>
    %108 = vector.broadcast %107 : vector<8x1xf32> to vector<8x32xf32>
    %109 = arith.mulf %98, %108 : vector<8x32xf32>
    %110 = vector.broadcast %91 : vector<1x32xf32> to vector<8x32xf32>
    %111 = arith.mulf %110, %109 : vector<8x32xf32>
    %112 = vector.broadcast %92 : vector<1x32xf32> to vector<8x32xf32>
    %113 = arith.addf %111, %112 : vector<8x32xf32>
    %114 = arith.addf %90, %113 : vector<8x32xf32>
    %c0_46 = arith.constant 0 : index
    %c0_47 = arith.constant 0 : index
    %115 = vector.load %arg14[%c0_46, %c0_47] : memref<1x32xf32, #tpu.memory_space<vmem>>, vector<1x32xf32>
    %c0_48 = arith.constant 0 : index
    %c0_49 = arith.constant 0 : index
    %116 = vector.load %arg15[%c0_48, %c0_49] : memref<1x32xf32, #tpu.memory_space<vmem>>, vector<1x32xf32>
    %cst_50 = arith.constant dense<0.000000e+00> : vector<8xf32>
    %117 = vector.multi_reduction <add>, %114, %cst_50 [1] : vector<8x32xf32> to vector<8xf32>
    %118 = vector.shape_cast %117 : vector<8xf32> to vector<8x1xf32>
    %cst_51 = arith.constant 3.200000e+01 : f32
    %119 = vector.broadcast %cst_51 : f32 to vector<8x1xf32>
    %120 = arith.divf %118, %119 : vector<8x1xf32>
    %121 = vector.broadcast %120 : vector<8x1xf32> to vector<8x32xf32>
    %122 = arith.subf %114, %121 : vector<8x32xf32>
    %123 = arith.mulf %122, %122 : vector<8x32xf32>
    %cst_52 = arith.constant dense<0.000000e+00> : vector<8xf32>
    %124 = vector.multi_reduction <add>, %123, %cst_52 [1] : vector<8x32xf32> to vector<8xf32>
    %125 = vector.shape_cast %124 : vector<8xf32> to vector<8x1xf32>
    %cst_53 = arith.constant 0.0322580636 : f32
    %126 = vector.broadcast %cst_53 : f32 to vector<8x1xf32>
    %127 = arith.mulf %125, %126 : vector<8x1xf32>
    %128 = math.sqrt %127 : vector<8x1xf32>
    %cst_54 = arith.constant 9.99999997E-7 : f32
    %129 = vector.broadcast %cst_54 : f32 to vector<8x1xf32>
    %130 = arith.addf %128, %129 : vector<8x1xf32>
    %131 = tpu.reciprocal %130 {approx = true} : vector<8x1xf32> -> vector<8x1xf32>
    %132 = vector.broadcast %131 : vector<8x1xf32> to vector<8x32xf32>
    %133 = arith.mulf %122, %132 : vector<8x32xf32>
    %134 = vector.broadcast %115 : vector<1x32xf32> to vector<8x32xf32>
    %135 = arith.mulf %134, %133 : vector<8x32xf32>
    %136 = vector.broadcast %116 : vector<1x32xf32> to vector<8x32xf32>
    %137 = arith.addf %135, %136 : vector<8x32xf32>
    %138 = arith.truncf %137 : vector<8x32xf32> to vector<8x32xbf16>
    %c0_55 = arith.constant 0 : index
    %c0_56 = arith.constant 0 : index
    %139 = vector.load %arg16[%c0_55, %c0_56] : memref<32x128xbf16, #tpu.memory_space<vmem>>, vector<32x128xbf16>
    %cst_57 = arith.constant dense<0.000000e+00> : vector<8x128xf32>
    %140 = tpu.matmul %138, %139, %cst_57 {dimension_numbers = #tpu.dot_dimension_numbers<[1], [0], [0], [1], [0, 0, 1, 1], [], []>} : vector<8x32xbf16>, vector<32x128xbf16>, vector<8x128xf32> -> vector<8x128xf32>
    %c0_58 = arith.constant 0 : index
    %c0_59 = arith.constant 0 : index
    %141 = vector.load %arg17[%c0_58, %c0_59] : memref<1x128xf32, #tpu.memory_space<vmem>>, vector<1x128xf32>
    %142 = vector.broadcast %141 : vector<1x128xf32> to vector<8x128xf32>
    %143 = arith.addf %140, %142 : vector<8x128xf32>
    %cst_60 = arith.constant 5.000000e-01 : f32
    %144 = vector.broadcast %cst_60 : f32 to vector<8x128xf32>
    %145 = arith.mulf %144, %143 : vector<8x128xf32>
    %146 = arith.mulf %143, %143 : vector<8x128xf32>
    %147 = arith.mulf %143, %146 : vector<8x128xf32>
    %cst_61 = arith.constant 4.471500e-02 : f32
    %148 = vector.broadcast %cst_61 : f32 to vector<8x128xf32>
    %149 = arith.mulf %148, %147 : vector<8x128xf32>
    %150 = arith.addf %143, %149 : vector<8x128xf32>
    %cst_62 = arith.constant 0.797884583 : f32
    %151 = vector.broadcast %cst_62 : f32 to vector<8x128xf32>
    %152 = arith.mulf %151, %150 : vector<8x128xf32>
    %153 = math.tanh %152 : vector<8x128xf32>
    %cst_63 = arith.constant 1.000000e+00 : f32
    %154 = vector.broadcast %cst_63 : f32 to vector<8x128xf32>
    %155 = arith.addf %154, %153 : vector<8x128xf32>
    %156 = arith.mulf %145, %155 : vector<8x128xf32>
    %157 = arith.truncf %156 : vector<8x128xf32> to vector<8x128xbf16>
    %c0_64 = arith.constant 0 : index
    %c0_65 = arith.constant 0 : index
    %158 = vector.load %arg18[%c0_64, %c0_65] : memref<128x32xbf16, #tpu.memory_space<vmem>>, vector<128x32xbf16>
    %cst_66 = arith.constant dense<0.000000e+00> : vector<8x32xf32>
    %159 = tpu.matmul %157, %158, %cst_66 {dimension_numbers = #tpu.dot_dimension_numbers<[1], [0], [0], [1], [0, 0, 1, 1], [], []>} : vector<8x128xbf16>, vector<128x32xbf16>, vector<8x32xf32> -> vector<8x32xf32>
    %c0_67 = arith.constant 0 : index
    %c0_68 = arith.constant 0 : index
    %160 = vector.load %arg19[%c0_67, %c0_68] : memref<1x32xf32, #tpu.memory_space<vmem>>, vector<1x32xf32>
    %161 = vector.broadcast %160 : vector<1x32xf32> to vector<8x32xf32>
    %162 = arith.addf %159, %161 : vector<8x32xf32>
    %163 = arith.addf %114, %162 : vector<8x32xf32>
    %c0_69 = arith.constant 0 : index
    %c0_70 = arith.constant 0 : index
    %c0_71 = arith.constant 0 : index
    %164 = vector.load %arg20[%c0_69, %c0_70, %c0_71] : memref<1x8x32xf32, #tpu.memory_space<vmem>>, vector<1x8x32xf32>
    %165 = vector.shape_cast %164 : vector<1x8x32xf32> to vector<8x32xf32>
    %166 = vector.shape_cast %163 : vector<8x32xf32> to vector<1x8x32xf32>
    tpu.vector_store %arg20[%c0_69, %c0_70, %c0_71], %166 {strides = array<i32>} : memref<1x8x32xf32, #tpu.memory_space<vmem>>, vector<1x8x32xf32>,
    return
  }
  func.func @transform_0(%arg0: i32, %arg1: i32) -> (i32, i32, i32) {
    %c0_i32 = arith.constant 0 : i32
    %c0_i32_0 = arith.constant 0 : i32
    %c0_i32_1 = arith.constant 0 : i32
    return %arg0, %c0_i32, %c0_i32_0 : i32, i32, i32
  }
  func.func @transform_1(%arg0: i32, %arg1: i32) -> (i32, i32, i32, i32) {
    %c0_i32 = arith.constant 0 : i32
    %c0_i32_0 = arith.constant 0 : i32
    %c0_i32_1 = arith.constant 0 : i32
    return %arg0, %c0_i32, %arg1, %c0_i32_0 : i32, i32, i32, i32
  }
  func.func @transform_2(%arg0: i32, %arg1: i32) -> (i32, i32) {
    %c0_i32 = arith.constant 0 : i32
    %c0_i32_0 = arith.constant 0 : i32
    %c0_i32_1 = arith.constant 0 : i32
    return %c0_i32, %c0_i32_0 : i32, i32
  }
  func.func @transform_3(%arg0: i32, %arg1: i32) -> (i32, i32) {
    %c0_i32 = arith.constant 0 : i32
    %c0_i32_0 = arith.constant 0 : i32
    %c0_i32_1 = arith.constant 0 : i32
    return %c0_i32, %c0_i32_0 : i32, i32
  }
  func.func @transform_4(%arg0: i32, %arg1: i32) -> (i32, i32) {
    %c0_i32 = arith.constant 0 : i32
    %c0_i32_0 = arith.constant 0 : i32
    %c0_i32_1 = arith.constant 0 : i32
    return %c0_i32, %c0_i32_0 : i32, i32
  }
  func.func @transform_5(%arg0: i32, %arg1: i32) -> (i32, i32) {
    %c0_i32 = arith.constant 0 : i32
    %c0_i32_0 = arith.constant 0 : i32
    %c0_i32_1 = arith.constant 0 : i32
    return %c0_i32, %c0_i32_0 : i32, i32
  }
  func.func @transform_6(%arg0: i32, %arg1: i32) -> (i32, i32) {
    %c0_i32 = arith.constant 0 : i32
    %c0_i32_0 = arith.constant 0 : i32
    %c0_i32_1 = arith.constant 0 : i32
    return %c0_i32, %c0_i32_0 : i32, i32
  }
  func.func @transform_7(%arg0: i32, %arg1: i32) -> (i32, i32) {
    %c0_i32 = arith.constant 0 : i32
    %c0_i32_0 = arith.constant 0 : i32
    %c0_i32_1 = arith.constant 0 : i32
    return %c0_i32, %c0_i32_0 : i32, i32
  }
  func.func @transform_8(%arg0: i32, %arg1: i32) -> (i32, i32) {
    %c0_i32 = arith.constant 0 : i32
    %c0_i32_0 = arith.constant 0 : i32
    %c0_i32_1 = arith.constant 0 : i32
    return %c0_i32, %c0_i32_0 : i32, i32
  }
  func.func @transform_9(%arg0: i32, %arg1: i32) -> (i32, i32) {
    %c0_i32 = arith.constant 0 : i32
    %c0_i32_0 = arith.constant 0 : i32
    %c0_i32_1 = arith.constant 0 : i32
    return %c0_i32, %c0_i32_0 : i32, i32
  }
  func.func @transform_10(%arg0: i32, %arg1: i32) -> (i32, i32) {
    %c0_i32 = arith.constant 0 : i32
    %c0_i32_0 = arith.constant 0 : i32
    %c0_i32_1 = arith.constant 0 : i32
    return %c0_i32, %c0_i32_0 : i32, i32
  }
  func.func @transform_11(%arg0: i32, %arg1: i32) -> (i32, i32) {
    %c0_i32 = arith.constant 0 : i32
    %c0_i32_0 = arith.constant 0 : i32
    %c0_i32_1 = arith.constant 0 : i32
    return %c0_i32, %c0_i32_0 : i32, i32
  }
  func.func @transform_12(%arg0: i32, %arg1: i32) -> (i32, i32) {
    %c0_i32 = arith.constant 0 : i32
    %c0_i32_0 = arith.constant 0 : i32
    %c0_i32_1 = arith.constant 0 : i32
    return %c0_i32, %c0_i32_0 : i32, i32
  }
  func.func @transform_13(%arg0: i32, %arg1: i32) -> (i32, i32) {
    %c0_i32 = arith.constant 0 : i32
    %c0_i32_0 = arith.constant 0 : i32
    %c0_i32_1 = arith.constant 0 : i32
    return %c0_i32, %c0_i32_0 : i32, i32
  }
  func.func @transform_14(%arg0: i32, %arg1: i32) -> (i32, i32) {
    %c0_i32 = arith.constant 0 : i32
    %c0_i32_0 = arith.constant 0 : i32
    %c0_i32_1 = arith.constant 0 : i32
    return %c0_i32, %c0_i32_0 : i32, i32
  }
  func.func @transform_15(%arg0: i32, %arg1: i32) -> (i32, i32) {
    %c0_i32 = arith.constant 0 : i32
    %c0_i32_0 = arith.constant 0 : i32
    %c0_i32_1 = arith.constant 0 : i32
    return %c0_i32, %c0_i32_0 : i32, i32
  }
  func.func @transform_16(%arg0: i32, %arg1: i32) -> (i32, i32) {
    %c0_i32 = arith.constant 0 : i32
    %c0_i32_0 = arith.constant 0 : i32
    %c0_i32_1 = arith.constant 0 : i32
    return %c0_i32, %c0_i32_0 : i32, i32
  }
  func.func @transform_17(%arg0: i32, %arg1: i32) -> (i32, i32) {
    %c0_i32 = arith.constant 0 : i32
    %c0_i32_0 = arith.constant 0 : i32
    %c0_i32_1 = arith.constant 0 : i32
    return %c0_i32, %c0_i32_0 : i32, i32
  }
  func.func @transform_18(%arg0: i32, %arg1: i32) -> (i32, i32, i32) {
    %c0_i32 = arith.constant 0 : i32
    %c0_i32_0 = arith.constant 0 : i32
    return %arg0, %arg1, %c0_i32 : i32, i32, i32
  }
  func.func @transform_19(%arg0: i32, %arg1: i32) -> (i32, i32, i32, i32) {
    %c0_i32 = arith.constant 0 : i32
    %c0_i32_0 = arith.constant 0 : i32
    %c0_i32_1 = arith.constant 0 : i32
    return %arg0, %c0_i32, %arg1, %c0_i32_0 : i32, i32, i32, i32
  }
}

</mosaic_0001>

<llo_original>
// kernel: tpu_custom_call.1
$region0: #{tpu_custom_call.1}
  #allocation0 [shape = 'u32[]', space=smem, size = 0x4, offset = 0x4, fixed_abs, tag = 'smem constant byte address 0x4 - core index']
  #allocation1 [shape = 'u32[144,128]{1,0:T(1,128)}', space=vmem, size = 0x12000, scoped, tag = 'internal scratch']
  %s0 = inlined_call_operand.hbm [shape: f32[2,8,32], index: 0, kind: input, shape index: {}]
  %s1 = inlined_call_operand.hbm [shape: f32[2,1,8,8], index: 1, kind: input, shape index: {}]
  %s2 = inlined_call_operand.hbm [shape: bf16[32,32], index: 2, kind: input, shape index: {}]
  %s3 = inlined_call_operand.hbm [shape: f32[1,32], index: 3, kind: input, shape index: {}]
  %s4 = inlined_call_operand.hbm [shape: bf16[32,32], index: 4, kind: input, shape index: {}]
  %s5 = inlined_call_operand.hbm [shape: f32[1,32], index: 5, kind: input, shape index: {}]
  %s6 = inlined_call_operand.hbm [shape: bf16[32,32], index: 6, kind: input, shape index: {}]
  %s7 = inlined_call_operand.hbm [shape: f32[1,32], index: 7, kind: input, shape index: {}]
  %s8 = inlined_call_operand.hbm [shape: bf16[32,32], index: 8, kind: input, shape index: {}]
  %s9 = inlined_call_operand.hbm [shape: f32[1,32], index: 9, kind: input, shape index: {}]
  %s10 = inlined_call_operand.hbm [shape: f32[1,32], index: 10, kind: input, shape index: {}]
  %s11 = inlined_call_operand.hbm [shape: f32[1,32], index: 11, kind: input, shape index: {}]
  %s12 = inlined_call_operand.hbm [shape: f32[1,32], index: 12, kind: input, shape index: {}]
  %s13 = inlined_call_operand.hbm [shape: f32[1,32], index: 13, kind: input, shape index: {}]
  %s14 = inlined_call_operand.hbm [shape: bf16[32,128], index: 14, kind: input, shape index: {}]
  %s15 = inlined_call_operand.hbm [shape: f32[1,128], index: 15, kind: input, shape index: {}]
  %s16 = inlined_call_operand.hbm [shape: bf16[128,32], index: 16, kind: input, shape index: {}]
  %s17 = inlined_call_operand.hbm [shape: f32[1,32], index: 17, kind: input, shape index: {}]
  %s18 = inlined_call_operand.hbm [shape: f32[2,8,32], index: 18, kind: output, shape index: {0}]
  %s19 = inlined_call_operand.hbm [shape: f32[2,4,8,8], index: 19, kind: output, shape index: {1}]
  %20 = xla_tuple %s18, %s19
  %s21 = sld [smem:[#allocation0]]
  $region185: #{tpu_custom_call.1} parent=0
    _
  %s23 = ssub.s32 1, %s21
  %s24 = scalar_select 0, %s23, %s21
  $region1: #{tpu_custom_call.1} parent=0
    #allocation2 [shape = 'u8[8192]{0}', space=vmem, size = 0x2000, scoped, tag = 'input window, operand 0']
    #allocation3 [shape = 's32[2]{0}', space=sflag, size = 0x8, scoped, tag = 'scoped memory for tpu_custom_call.1']
    #allocation4 [shape = 's32[2]{0}', space=sflag, size = 0x8, scoped, tag = 'scoped memory for tpu_custom_call.1']
    #allocation5 [shape = 'u8[8192]{0}', space=vmem, size = 0x2000, scoped, tag = 'input window, operand 1']
    #allocation6 [shape = 's32[2]{0}', space=sflag, size = 0x8, scoped, tag = 'scoped memory for tpu_custom_call.1']
    #allocation7 [shape = 'u8[8192]{0}', space=vmem, size = 0x2000, scoped, tag = 'input window, operand 2, single buffered']
    #allocation8 [shape = 'u8[512]{0}', space=vmem, size = 0x400, scoped, tag = 'input window, operand 3, single buffered']
    #allocation9 [shape = 's32[1]{0}', space=sflag, size = 0x4, scoped, tag = 'scoped memory for tpu_custom_call.1']
    #allocation10 [shape = 'u8[8192]{0}', space=vmem, size = 0x2000, scoped, tag = 'input window, operand 4, single buffered']
    #allocation11 [shape = 'u8[512]{0}', space=vmem, size = 0x400, scoped, tag = 'input window, operand 5, single buffered']
    #allocation12 [shape = 's32[1]{0}', space=sflag, size = 0x4, scoped, tag = 'scoped memory for tpu_custom_call.1']
    #allocation13 [shape = 'u8[8192]{0}', space=vmem, size = 0x2000, scoped, tag = 'input window, operand 6, single buffered']
    #allocation14 [shape = 'u8[512]{0}', space=vmem, size = 0x400, scoped, tag = 'input window, operand 7, single buffered']
    #allocation15 [shape = 's32[1]{0}', space=sflag, size = 0x4, scoped, tag = 'scoped memory for tpu_custom_call.1']
    #allocation16 [shape = 'u8[8192]{0}', space=vmem, size = 0x2000, scoped, tag = 'input window, operand 8, single buffered']
    #allocation17 [shape = 'u8[512]{0}', space=vmem, size = 0x400, scoped, tag = 'input window, operand 9, single buffered']
    #allocation18 [shape = 's32[1]{0}', space=sflag, size = 0x4, scoped, tag = 'scoped memory for tpu_custom_call.1']
    #allocation19 [shape = 'u8[512]{0}', space=vmem, size = 0x400, scoped, tag = 'input window, operand 10, single buffered']
    #allocation20 [shape = 'u8[512]{0}', space=vmem, size = 0x400, scoped, tag = 'input window, operand 11, single buffered']
    #allocation21 [shape = 's32[1]{0}', space=sflag, size = 0x4, scoped, tag = 'scoped memory for tpu_custom_call.1']
    #allocation22 [shape = 'u8[512]{0}', space=vmem, size = 0x400, scoped, tag = 'input window, operand 12, single buffered']
    #allocation23 [shape = 'u8[512]{0}', space=vmem, size = 0x400, scoped, tag = 'input window, operand 13, single buffered']
    #allocation24 [shape = 's32[1]{0}', space=sflag, size = 0x4, scoped, tag = 'scoped memory for tpu_custom_call.1']
    #allocation25 [shape = 'u8[8192]{0}', space=vmem, size = 0x2000, scoped, tag = 'input window, operand 14, single buffered']
    #allocation26 [shape = 'u8[512]{0}', space=vmem, size = 0x400, scoped, tag = 'input window, operand 15, single buffered']
    #allocation27 [shape = 's32[1]{0}', space=sflag, size = 0x4, scoped, tag = 'scoped memory for tpu_custom_call.1']
    #allocation28 [shape = 'u8[32768]{0}', space=vmem, size = 0x8000, scoped, tag = 'input window, operand 16, single buffered']
    #allocation29 [shape = 'u8[512]{0}', space=vmem, size = 0x400, scoped, tag = 'input window, operand 17, single buffered']
    #allocation30 [shape = 's32[1]{0}', space=sflag, size = 0x4, scoped, tag = 'scoped memory for tpu_custom_call.1']
    #allocation31 [shape = 'u8[8192]{0}', space=vmem, size = 0x2000, scoped, tag = 'output window, operand 0']
    #allocation32 [shape = 'u8[32768]{0}', space=vmem, size = 0x8000, scoped, tag = 'output window, operand 1']
    #allocation33 [shape = 's32[2]{0}', space=sflag, size = 0x8, scoped, tag = 'scoped memory for tpu_custom_call.1']
    %25 = vsyncpa [#allocation3], 0
    %s26 = scalar_lea.sflag [#allocation3], 1
    %27 = vsyncpa %s26, 0
    %28 = vsyncpa [#allocation6], 0
    %s29 = scalar_lea.sflag [#allocation6], 1
    %30 = vsyncpa %s29, 0
    %31 = vsyncpa [#allocation9], 0
    %32 = vsyncpa [#allocation12], 0
    %33 = vsyncpa [#allocation15], 0
    %34 = vsyncpa [#allocation18], 0
    %35 = vsyncpa [#allocation21], 0
    %36 = vsyncpa [#allocation24], 0
    %37 = vsyncpa [#allocation27], 0
    %38 = vsyncpa [#allocation30], 0
    %39 = vsyncpa [#allocation4], 0
    %s40 = scalar_lea.sflag [#allocation4], 1
    %41 = vsyncpa %s40, 0
    %42 = vsyncpa [#allocation33], 0
    %s43 = scalar_lea.sflag [#allocation33], 1
    %44 = vsyncpa %s43, 0
    loop: start=0, step=1, limit=4
    $region2: #{tpu_custom_call.1} parent=1 // loop_pre_header
      _
    $region3: #{tpu_custom_call.1} parent=1 // loop_header
      %s46 = sphi 0, %s50
      %p47 = scmp.ge.s32.totalorder %s46, 4
      %s53 = sphi 0, %s65
      %s54 = sphi 0, %s61
      %s55 = sphi 0, %s53
      %s56 = sphi 0, %s54
      %s57 = sphi 0, %s55
      %s58 = sphi 0, %s56
      %s68 = sphi 0, %s70
      %s71 = sphi 0, %s68
      %s72 = sphi 0, %s71
      %s88 = sphi 0, %s72
      %s96 = sphi 0, %s98
      %s99 = sphi 0, %s96
      %s100 = sphi 0, %s99
      %s116 = sphi 0, %s100
      %s120 = sphi 0, %s120
      %s122 = sphi 0, %s120
      %s123 = sphi 0, %s122
      %s137 = sphi 0, %s123
      %s141 = sphi 0, %s141
      %s143 = sphi 0, %s141
      %s144 = sphi 0, %s143
      %s158 = sphi 0, %s144
      %s162 = sphi 0, %s162
      %s164 = sphi 0, %s162
      %s165 = sphi 0, %s164
      %s179 = sphi 0, %s165
      %s183 = sphi 0, %s183
      %s185 = sphi 0, %s183
      %s186 = sphi 0, %s185
      %s200 = sphi 0, %s186
      %s204 = sphi 0, %s204
      %s206 = sphi 0, %s204
      %s207 = sphi 0, %s206
      %s221 = sphi 0, %s207
      %s225 = sphi 0, %s225
      %s227 = sphi 0, %s225
      %s228 = sphi 0, %s227
      %s242 = sphi 0, %s228
      %s246 = sphi 0, %s246
      %s248 = sphi 0, %s246
      %s249 = sphi 0, %s248
      %s263 = sphi 0, %s249
      %s267 = sphi 0, %s267
      %s269 = sphi 0, %s267
      %s270 = sphi 0, %s269
      %s284 = sphi 0, %s270
      %s288 = sphi 0, %s288
      %s290 = sphi 0, %s288
      %s291 = sphi 0, %s290
      %s305 = sphi 0, %s291
      %s309 = sphi 0, %s309
      %s311 = sphi 0, %s309
      %s312 = sphi 0, %s311
      %s326 = sphi 0, %s312
      %s330 = sphi 0, %s330
      %s332 = sphi 0, %s330
      %s333 = sphi 0, %s332
      %s347 = sphi 0, %s333
      %s351 = sphi 0, %s351
      %s353 = sphi 0, %s351
      %s354 = sphi 0, %s353
      %s368 = sphi 0, %s354
      %s372 = sphi 0, %s372
      %s374 = sphi 0, %s372
      %s375 = sphi 0, %s374
      %s389 = sphi 0, %s375
      %s393 = sphi 0, %s393
      %s395 = sphi 0, %s393
      %s396 = sphi 0, %s395
      %s410 = sphi 0, %s396
      %s414 = sphi 0, %s414
      %s416 = sphi 0, %s414
      %s417 = sphi 0, %s416
      %s431 = sphi 0, %s417
      %s435 = sphi 0, %s435
      %s437 = sphi 0, %s435
      %s438 = sphi 0, %s437
      %s452 = sphi 0, %s438
      %s460 = sphi 0, %s462
      %s463 = sphi 0, %s460
      %s464 = sphi 0, %s463
      %s480 = sphi 0, %s464
      %s488 = sphi 0, %s490
      %s491 = sphi 0, %s488
      %s492 = sphi 0, %s491
      %s508 = sphi 0, %s492
    $region4: #{tpu_custom_call.1} parent=1 // loop_header_branch
      %49 = sbr.rel (%p47) target = $region8
    $region5: #{tpu_custom_call.1} parent=1 // loop_body
      %s51 = ssub.s32 %s46, 1
      %s52 = ssub.s32 %s46, 2
      %s59 = sadd.s32 1, %s54
      %p60 = scmp.ge.s32.totalorder %s59, 1
      %s61 = scalar_select %p60, 0, %s59
      %s62 = sadd.s32 1, %s53
      %s63 = scalar_select %p60, %s62, %s53
      %p64 = scmp.ge.s32.totalorder %s63, 2
      %s65 = scalar_select %p64, 0, %s63
      %s66 = ssub.s32 %s53, %s65
      %p67 = scmp.eq.s32.totalorder %s66, 0
      %s69 = sadd.s32 %s68, 1
      %s70 = scalar_select %p67, %s68, %s69
      %p73 = pneg %p67
      %p74 = scmp.eq.s32.totalorder %s46, 1
      %p75 = por %p73, %p74
      %p76 = scmp.ne.s32.totalorder %s68, %s71
      %p77 = scmp.eq.s32.totalorder %s46, 0
      %p78 = por %p76, %p77
      %p79 = scmp.ne.s32.totalorder %s68, %s71
      %p80 = scmp.eq.s32.totalorder %s51, 1
      %p81 = por %p79, %p80
      %p82 = scmp.ne.s32.totalorder %s71, %s72
      %p83 = scmp.eq.s32.totalorder %s51, 0
      %p84 = por %p82, %p83
      %p85 = scmp.ne.s32.totalorder %s71, %s72
      %p86 = scmp.eq.s32.totalorder %s52, 1
      %p87 = por %p85, %p86
      %p89 = scmp.ne.s32.totalorder %s72, %s88
      %p90 = scmp.eq.s32.totalorder %s52, 0
      %p91 = por %p89, %p90
      %s92 = ssub.s32 %s53, %s65
      %s93 = ssub.s32 %s54, %s61
      %s94 = sor.u32 %s92, %s93
      %p95 = scmp.eq.s32.totalorder %s94, 0
      %s97 = sadd.s32 %s96, 1
      %s98 = scalar_select %p95, %s96, %s97
      %p101 = pneg %p95
      %p102 = scmp.eq.s32.totalorder %s46, 1
      %p103 = por %p101, %p102
      %p104 = scmp.ne.s32.totalorder %s96, %s99
      %p105 = scmp.eq.s32.totalorder %s46, 0
      %p106 = por %p104, %p105
      %p107 = scmp.ne.s32.totalorder %s96, %s99
      %p108 = scmp.eq.s32.totalorder %s51, 1
      %p109 = por %p107, %p108
      %p110 = scmp.ne.s32.totalorder %s99, %s100
      %p111 = scmp.eq.s32.totalorder %s51, 0
      %p112 = por %p110, %p111
      %p113 = scmp.ne.s32.totalorder %s99, %s100
      %p114 = scmp.eq.s32.totalorder %s52, 1
      %p115 = por %p113, %p114
      %p117 = scmp.ne.s32.totalorder %s100, %s116
      %p118 = scmp.eq.s32.totalorder %s52, 0
      %p119 = por %p117, %p118
      %s121 = sadd.s32 %s120, 1
      %p124 = scmp.eq.s32.totalorder %s46, 1
      %p125 = scmp.ne.s32.totalorder %s120, %s122
      %p126 = scmp.eq.s32.totalorder %s46, 0
      %p127 = por %p125, %p126
      %p128 = scmp.ne.s32.totalorder %s120, %s122
      %p129 = scmp.eq.s32.totalorder %s51, 1
      %p130 = por %p128, %p129
      %p131 = scmp.ne.s32.totalorder %s122, %s123
      %p132 = scmp.eq.s32.totalorder %s51, 0
      %p133 = por %p131, %p132
      %p134 = scmp.ne.s32.totalorder %s122, %s123
      %p135 = scmp.eq.s32.totalorder %s52, 1
      %p136 = por %p134, %p135
      %p138 = scmp.ne.s32.totalorder %s123, %s137
      %p139 = scmp.eq.s32.totalorder %s52, 0
      %p140 = por %p138, %p139
      %s142 = sadd.s32 %s141, 1
      %p145 = scmp.eq.s32.totalorder %s46, 1
      %p146 = scmp.ne.s32.totalorder %s141, %s143
      %p147 = scmp.eq.s32.totalorder %s46, 0
      %p148 = por %p146, %p147
      %p149 = scmp.ne.s32.totalorder %s141, %s143
      %p150 = scmp.eq.s32.totalorder %s51, 1
      %p151 = por %p149, %p150
      %p152 = scmp.ne.s32.totalorder %s143, %s144
      %p153 = scmp.eq.s32.totalorder %s51, 0
      %p154 = por %p152, %p153
      %p155 = scmp.ne.s32.totalorder %s143, %s144
      %p156 = scmp.eq.s32.totalorder %s52, 1
      %p157 = por %p155, %p156
      %p159 = scmp.ne.s32.totalorder %s144, %s158
      %p160 = scmp.eq.s32.totalorder %s52, 0
      %p161 = por %p159, %p160
      %s163 = sadd.s32 %s162, 1
      %p166 = scmp.eq.s32.totalorder %s46, 1
      %p167 = scmp.ne.s32.totalorder %s162, %s164
      %p168 = scmp.eq.s32.totalorder %s46, 0
      %p169 = por %p167, %p168
      %p170 = scmp.ne.s32.totalorder %s162, %s164
      %p171 = scmp.eq.s32.totalorder %s51, 1
      %p172 = por %p170, %p171
      %p173 = scmp.ne.s32.totalorder %s164, %s165
      %p174 = scmp.eq.s32.totalorder %s51, 0
      %p175 = por %p173, %p174
      %p176 = scmp.ne.s32.totalorder %s164, %s165
      %p177 = scmp.eq.s32.totalorder %s52, 1
      %p178 = por %p176, %p177
      %p180 = scmp.ne.s32.totalorder %s165, %s179
      %p181 = scmp.eq.s32.totalorder %s52, 0
      %p182 = por %p180, %p181
      %s184 = sadd.s32 %s183, 1
      %p187 = scmp.eq.s32.totalorder %s46, 1
      %p188 = scmp.ne.s32.totalorder %s183, %s185
      %p189 = scmp.eq.s32.totalorder %s46, 0
      %p190 = por %p188, %p189
      %p191 = scmp.ne.s32.totalorder %s183, %s185
      %p192 = scmp.eq.s32.totalorder %s51, 1
      %p193 = por %p191, %p192
      %p194 = scmp.ne.s32.totalorder %s185, %s186
      %p195 = scmp.eq.s32.totalorder %s51, 0
      %p196 = por %p194, %p195
      %p197 = scmp.ne.s32.totalorder %s185, %s186
      %p198 = scmp.eq.s32.totalorder %s52, 1
      %p199 = por %p197, %p198
      %p201 = scmp.ne.s32.totalorder %s186, %s200
      %p202 = scmp.eq.s32.totalorder %s52, 0
      %p203 = por %p201, %p202
      %s205 = sadd.s32 %s204, 1
      %p208 = scmp.eq.s32.totalorder %s46, 1
      %p209 = scmp.ne.s32.totalorder %s204, %s206
      %p210 = scmp.eq.s32.totalorder %s46, 0
      %p211 = por %p209, %p210
      %p212 = scmp.ne.s32.totalorder %s204, %s206
      %p213 = scmp.eq.s32.totalorder %s51, 1
      %p214 = por %p212, %p213
      %p215 = scmp.ne.s32.totalorder %s206, %s207
      %p216 = scmp.eq.s32.totalorder %s51, 0
      %p217 = por %p215, %p216
      %p218 = scmp.ne.s32.totalorder %s206, %s207
      %p219 = scmp.eq.s32.totalorder %s52, 1
      %p220 = por %p218, %p219
      %p222 = scmp.ne.s32.totalorder %s207, %s221
      %p223 = scmp.eq.s32.totalorder %s52, 0
      %p224 = por %p222, %p223
      %s226 = sadd.s32 %s225, 1
      %p229 = scmp.eq.s32.totalorder %s46, 1
      %p230 = scmp.ne.s32.totalorder %s225, %s227
      %p231 = scmp.eq.s32.totalorder %s46, 0
      %p232 = por %p230, %p231
      %p233 = scmp.ne.s32.totalorder %s225, %s227
      %p234 = scmp.eq.s32.totalorder %s51, 1
      %p235 = por %p233, %p234
      %p236 = scmp.ne.s32.totalorder %s227, %s228
      %p237 = scmp.eq.s32.totalorder %s51, 0
      %p238 = por %p236, %p237
      %p239 = scmp.ne.s32.totalorder %s227, %s228
      %p240 = scmp.eq.s32.totalorder %s52, 1
      %p241 = por %p239, %p240
      %p243 = scmp.ne.s32.totalorder %s228, %s242
      %p244 = scmp.eq.s32.totalorder %s52, 0
      %p245 = por %p243, %p244
      %s247 = sadd.s32 %s246, 1
      %p250 = scmp.eq.s32.totalorder %s46, 1
      %p251 = scmp.ne.s32.totalorder %s246, %s248
      %p252 = scmp.eq.s32.totalorder %s46, 0
      %p253 = por %p251, %p252
      %p254 = scmp.ne.s32.totalorder %s246, %s248
      %p255 = scmp.eq.s32.totalorder %s51, 1
      %p256 = por %p254, %p255
      %p257 = scmp.ne.s32.totalorder %s248, %s249
      %p258 = scmp.eq.s32.totalorder %s51, 0
      %p259 = por %p257, %p258
      %p260 = scmp.ne.s32.totalorder %s248, %s249
      %p261 = scmp.eq.s32.totalorder %s52, 1
      %p262 = por %p260, %p261
      %p264 = scmp.ne.s32.totalorder %s249, %s263
      %p265 = scmp.eq.s32.totalorder %s52, 0
      %p266 = por %p264, %p265
      %s268 = sadd.s32 %s267, 1
      %p271 = scmp.eq.s32.totalorder %s46, 1
      %p272 = scmp.ne.s32.totalorder %s267, %s269
      %p273 = scmp.eq.s32.totalorder %s46, 0
      %p274 = por %p272, %p273
      %p275 = scmp.ne.s32.totalorder %s267, %s269
      %p276 = scmp.eq.s32.totalorder %s51, 1
      %p277 = por %p275, %p276
      %p278 = scmp.ne.s32.totalorder %s269, %s270
      %p279 = scmp.eq.s32.totalorder %s51, 0
      %p280 = por %p278, %p279
      %p281 = scmp.ne.s32.totalorder %s269, %s270
      %p282 = scmp.eq.s32.totalorder %s52, 1
      %p283 = por %p281, %p282
      %p285 = scmp.ne.s32.totalorder %s270, %s284
      %p286 = scmp.eq.s32.totalorder %s52, 0
      %p287 = por %p285, %p286
      %s289 = sadd.s32 %s288, 1
      %p292 = scmp.eq.s32.totalorder %s46, 1
      %p293 = scmp.ne.s32.totalorder %s288, %s290
      %p294 = scmp.eq.s32.totalorder %s46, 0
      %p295 = por %p293, %p294
      %p296 = scmp.ne.s32.totalorder %s288, %s290
      %p297 = scmp.eq.s32.totalorder %s51, 1
      %p298 = por %p296, %p297
      %p299 = scmp.ne.s32.totalorder %s290, %s291
      %p300 = scmp.eq.s32.totalorder %s51, 0
      %p301 = por %p299, %p300
      %p302 = scmp.ne.s32.totalorder %s290, %s291
      %p303 = scmp.eq.s32.totalorder %s52, 1
      %p304 = por %p302, %p303
      %p306 = scmp.ne.s32.totalorder %s291, %s305
      %p307 = scmp.eq.s32.totalorder %s52, 0
      %p308 = por %p306, %p307
      %s310 = sadd.s32 %s309, 1
      %p313 = scmp.eq.s32.totalorder %s46, 1
      %p314 = scmp.ne.s32.totalorder %s309, %s311
      %p315 = scmp.eq.s32.totalorder %s46, 0
      %p316 = por %p314, %p315
      %p317 = scmp.ne.s32.totalorder %s309, %s311
      %p318 = scmp.eq.s32.totalorder %s51, 1
      %p319 = por %p317, %p318
      %p320 = scmp.ne.s32.totalorder %s311, %s312
      %p321 = scmp.eq.s32.totalorder %s51, 0
      %p322 = por %p320, %p321
      %p323 = scmp.ne.s32.totalorder %s311, %s312
      %p324 = scmp.eq.s32.totalorder %s52, 1
      %p325 = por %p323, %p324
      %p327 = scmp.ne.s32.totalorder %s312, %s326
      %p328 = scmp.eq.s32.totalorder %s52, 0
      %p329 = por %p327, %p328
      %s331 = sadd.s32 %s330, 1
      %p334 = scmp.eq.s32.totalorder %s46, 1
      %p335 = scmp.ne.s32.totalorder %s330, %s332
      %p336 = scmp.eq.s32.totalorder %s46, 0
      %p337 = por %p335, %p336
      %p338 = scmp.ne.s32.totalorder %s330, %s332
      %p339 = scmp.eq.s32.totalorder %s51, 1
      %p340 = por %p338, %p339
      %p341 = scmp.ne.s32.totalorder %s332, %s333
      %p342 = scmp.eq.s32.totalorder %s51, 0
      %p343 = por %p341, %p342
      %p344 = scmp.ne.s32.totalorder %s332, %s333
      %p345 = scmp.eq.s32.totalorder %s52, 1
      %p346 = por %p344, %p345
      %p348 = scmp.ne.s32.totalorder %s333, %s347
      %p349 = scmp.eq.s32.totalorder %s52, 0
      %p350 = por %p348, %p349
      %s352 = sadd.s32 %s351, 1
      %p355 = scmp.eq.s32.totalorder %s46, 1
      %p356 = scmp.ne.s32.totalorder %s351, %s353
      %p357 = scmp.eq.s32.totalorder %s46, 0
      %p358 = por %p356, %p357
      %p359 = scmp.ne.s32.totalorder %s351, %s353
      %p360 = scmp.eq.s32.totalorder %s51, 1
      %p361 = por %p359, %p360
      %p362 = scmp.ne.s32.totalorder %s353, %s354
      %p363 = scmp.eq.s32.totalorder %s51, 0
      %p364 = por %p362, %p363
      %p365 = scmp.ne.s32.totalorder %s353, %s354
      %p366 = scmp.eq.s32.totalorder %s52, 1
      %p367 = por %p365, %p366
      %p369 = scmp.ne.s32.totalorder %s354, %s368
      %p370 = scmp.eq.s32.totalorder %s52, 0
      %p371 = por %p369, %p370
      %s373 = sadd.s32 %s372, 1
      %p376 = scmp.eq.s32.totalorder %s46, 1
      %p377 = scmp.ne.s32.totalorder %s372, %s374
      %p378 = scmp.eq.s32.totalorder %s46, 0
      %p379 = por %p377, %p378
      %p380 = scmp.ne.s32.totalorder %s372, %s374
      %p381 = scmp.eq.s32.totalorder %s51, 1
      %p382 = por %p380, %p381
      %p383 = scmp.ne.s32.totalorder %s374, %s375
      %p384 = scmp.eq.s32.totalorder %s51, 0
      %p385 = por %p383, %p384
      %p386 = scmp.ne.s32.totalorder %s374, %s375
      %p387 = scmp.eq.s32.totalorder %s52, 1
      %p388 = por %p386, %p387
      %p390 = scmp.ne.s32.totalorder %s375, %s389
      %p391 = scmp.eq.s32.totalorder %s52, 0
      %p392 = por %p390, %p391
      %s394 = sadd.s32 %s393, 1
      %p397 = scmp.eq.s32.totalorder %s46, 1
      %p398 = scmp.ne.s32.totalorder %s393, %s395
      %p399 = scmp.eq.s32.totalorder %s46, 0
      %p400 = por %p398, %p399
      %p401 = scmp.ne.s32.totalorder %s393, %s395
      %p402 = scmp.eq.s32.totalorder %s51, 1
      %p403 = por %p401, %p402
      %p404 = scmp.ne.s32.totalorder %s395, %s396
      %p405 = scmp.eq.s32.totalorder %s51, 0
      %p406 = por %p404, %p405
      %p407 = scmp.ne.s32.totalorder %s395, %s396
      %p408 = scmp.eq.s32.totalorder %s52, 1
      %p409 = por %p407, %p408
      %p411 = scmp.ne.s32.totalorder %s396, %s410
      %p412 = scmp.eq.s32.totalorder %s52, 0
      %p413 = por %p411, %p412
      %s415 = sadd.s32 %s414, 1
      %p418 = scmp.eq.s32.totalorder %s46, 1
      %p419 = scmp.ne.s32.totalorder %s414, %s416
      %p420 = scmp.eq.s32.totalorder %s46, 0
      %p421 = por %p419, %p420
      %p422 = scmp.ne.s32.totalorder %s414, %s416
      %p423 = scmp.eq.s32.totalorder %s51, 1
      %p424 = por %p422, %p423
      %p425 = scmp.ne.s32.totalorder %s416, %s417
      %p426 = scmp.eq.s32.totalorder %s51, 0
      %p427 = por %p425, %p426
      %p428 = scmp.ne.s32.totalorder %s416, %s417
      %p429 = scmp.eq.s32.totalorder %s52, 1
      %p430 = por %p428, %p429
      %p432 = scmp.ne.s32.totalorder %s417, %s431
      %p433 = scmp.eq.s32.totalorder %s52, 0
      %p434 = por %p432, %p433
      %s436 = sadd.s32 %s435, 1
      %p439 = scmp.eq.s32.totalorder %s46, 1
      %p440 = scmp.ne.s32.totalorder %s435, %s437
      %p441 = scmp.eq.s32.totalorder %s46, 0
      %p442 = por %p440, %p441
      %p443 = scmp.ne.s32.totalorder %s435, %s437
      %p444 = scmp.eq.s32.totalorder %s51, 1
      %p445 = por %p443, %p444
      %p446 = scmp.ne.s32.totalorder %s437, %s438
      %p447 = scmp.eq.s32.totalorder %s51, 0
      %p448 = por %p446, %p447
      %p449 = scmp.ne.s32.totalorder %s437, %s438
      %p450 = scmp.eq.s32.totalorder %s52, 1
      %p451 = por %p449, %p450
      %p453 = scmp.ne.s32.totalorder %s438, %s452
      %p454 = scmp.eq.s32.totalorder %s52, 0
      %p455 = por %p453, %p454
      %s456 = ssub.s32 %s53, %s65
      %s457 = ssub.s32 %s54, %s61
      %s458 = sor.u32 %s456, %s457
      %p459 = scmp.eq.s32.totalorder %s458, 0
      %s461 = sadd.s32 %s460, 1
      %s462 = scalar_select %p459, %s460, %s461
      %p465 = pneg %p459
      %p466 = scmp.eq.s32.totalorder %s46, 1
      %p467 = por %p465, %p466
      %p468 = scmp.ne.s32.totalorder %s460, %s463
      %p469 = scmp.eq.s32.totalorder %s46, 0
      %p470 = por %p468, %p469
      %p471 = scmp.ne.s32.totalorder %s460, %s463
      %p472 = scmp.eq.s32.totalorder %s51, 1
      %p473 = por %p471, %p472
      %p474 = scmp.ne.s32.totalorder %s463, %s464
      %p475 = scmp.eq.s32.totalorder %s51, 0
      %p476 = por %p474, %p475
      %p477 = scmp.ne.s32.totalorder %s463, %s464
      %p478 = scmp.eq.s32.totalorder %s52, 1
      %p479 = por %p477, %p478
      %p481 = scmp.ne.s32.totalorder %s464, %s480
      %p482 = scmp.eq.s32.totalorder %s52, 0
      %p483 = por %p481, %p482
      %s484 = ssub.s32 %s53, %s65
      %s485 = ssub.s32 %s54, %s61
      %s486 = sor.u32 %s484, %s485
      %p487 = scmp.eq.s32.totalorder %s486, 0
      %s489 = sadd.s32 %s488, 1
      %s490 = scalar_select %p487, %s488, %s489
      %p493 = pneg %p487
      %p494 = scmp.eq.s32.totalorder %s46, 1
      %p495 = por %p493, %p494
      %p496 = scmp.ne.s32.totalorder %s488, %s491
      %p497 = scmp.eq.s32.totalorder %s46, 0
      %p498 = por %p496, %p497
      %p499 = scmp.ne.s32.totalorder %s488, %s491
      %p500 = scmp.eq.s32.totalorder %s51, 1
      %p501 = por %p499, %p500
      %p502 = scmp.ne.s32.totalorder %s491, %s492
      %p503 = scmp.eq.s32.totalorder %s51, 0
      %p504 = por %p502, %p503
      %p505 = scmp.ne.s32.totalorder %s491, %s492
      %p506 = scmp.eq.s32.totalorder %s52, 1
      %p507 = por %p505, %p506
      %p509 = scmp.ne.s32.totalorder %s492, %s508
      %p510 = scmp.eq.s32.totalorder %s52, 0
      %p511 = por %p509, %p510
      %p512 = scmp.le.s32.totalorder 1, %s46
      %p513 = scmp.lt.s32.totalorder %s46, 3
      %p514 = pnand %p512, %p513
      %p515 = pneg %p514
      // Predicated region
      $region9: #{tpu_custom_call.1} parent=5 // pred_check
        _
      $region10: #{tpu_custom_call.1} parent=5 // pred_check_branch
        %517 = sbr.rel (%p514) target = $region12
      $region11: #{tpu_custom_call.1} parent=5 // pred_region
        %s518 = ssub.s32 %s46, 1
        // Predicated region
        $region13: #{tpu_custom_call.1} parent=11 // pred_check
          %p519 = pneg %p133
        $region14: #{tpu_custom_call.1} parent=11 // pred_check_branch
          %521 = sbr.rel (%p519) target = $region16
        $region15: #{tpu_custom_call.1} parent=11 // pred_region
          %s523 = ssub.s32 256, 256
          %524 = vsyncadd [#allocation6], %s523
          %s525 = sshll.u32 [#allocation7], 4
          %s526 = int_to_ptr.vmem [resolvable:$true] %s525
          %531 = dma.hbm_to_vmem [thread:$0]  %s2, 256, %s526, [#allocation6], 64, 64, 4
        $region16: #{tpu_custom_call.1} parent=11 // pred_fallthru
          _
        // Predicated region
        $region17: #{tpu_custom_call.1} parent=11 // pred_check
          %p532 = pneg %p154
        $region18: #{tpu_custom_call.1} parent=11 // pred_check_branch
          %534 = sbr.rel (%p532) target = $region20
        $region19: #{tpu_custom_call.1} parent=11 // pred_region
          %s536 = ssub.s32 16, 16
          %537 = vsyncadd [#allocation9], %s536
          %s539 = sshll.u32 [#allocation8], 4
          %s540 = int_to_ptr.vmem [resolvable:$true] %s539
          %542 = dma.hbm_to_vmem [thread:$0]  %s3, 16, %s540, [#allocation9]
        $region20: #{tpu_custom_call.1} parent=11 // pred_fallthru
          _
        // Predicated region
        $region21: #{tpu_custom_call.1} parent=11 // pred_check
          %p543 = pneg %p175
        $region22: #{tpu_custom_call.1} parent=11 // pred_check_branch
          %545 = sbr.rel (%p543) target = $region24
        $region23: #{tpu_custom_call.1} parent=11 // pred_region
          %s547 = ssub.s32 256, 256
          %548 = vsyncadd [#allocation9], %s547
          %s549 = sshll.u32 [#allocation10], 4
          %s550 = int_to_ptr.vmem [resolvable:$true] %s549
          %555 = dma.hbm_to_vmem [thread:$0]  %s4, 256, %s550, [#allocation9], 64, 64, 4
        $region24: #{tpu_custom_call.1} parent=11 // pred_fallthru
          _
        // Predicated region
        $region25: #{tpu_custom_call.1} parent=11 // pred_check
          %p556 = pneg %p196
        $region26: #{tpu_custom_call.1} parent=11 // pred_check_branch
          %558 = sbr.rel (%p556) target = $region28
        $region27: #{tpu_custom_call.1} parent=11 // pred_region
          %s560 = ssub.s32 16, 16
          %561 = vsyncadd [#allocation12], %s560
          %s563 = sshll.u32 [#allocation11], 4
          %s564 = int_to_ptr.vmem [resolvable:$true] %s563
          %566 = dma.hbm_to_vmem [thread:$0]  %s5, 16, %s564, [#allocation12]
        $region28: #{tpu_custom_call.1} parent=11 // pred_fallthru
          _
        // Predicated region
        $region29: #{tpu_custom_call.1} parent=11 // pred_check
          %p567 = pneg %p217
        $region30: #{tpu_custom_call.1} parent=11 // pred_check_branch
          %569 = sbr.rel (%p567) target = $region32
        $region31: #{tpu_custom_call.1} parent=11 // pred_region
          %s571 = ssub.s32 256, 256
          %572 = vsyncadd [#allocation12], %s571
          %s573 = sshll.u32 [#allocation13], 4
          %s574 = int_to_ptr.vmem [resolvable:$true] %s573
          %579 = dma.hbm_to_vmem [thread:$0]  %s6, 256, %s574, [#allocation12], 64, 64, 4
        $region32: #{tpu_custom_call.1} parent=11 // pred_fallthru
          _
        // Predicated region
        $region33: #{tpu_custom_call.1} parent=11 // pred_check
          %p580 = pneg %p238
        $region34: #{tpu_custom_call.1} parent=11 // pred_check_branch
          %582 = sbr.rel (%p580) target = $region36
        $region35: #{tpu_custom_call.1} parent=11 // pred_region
          %s584 = ssub.s32 16, 16
          %585 = vsyncadd [#allocation15], %s584
          %s587 = sshll.u32 [#allocation14], 4
          %s588 = int_to_ptr.vmem [resolvable:$true] %s587
          %590 = dma.hbm_to_vmem [thread:$0]  %s7, 16, %s588, [#allocation15]
        $region36: #{tpu_custom_call.1} parent=11 // pred_fallthru
          _
        // Predicated region
        $region37: #{tpu_custom_call.1} parent=11 // pred_check
          %p591 = pneg %p259
        $region38: #{tpu_custom_call.1} parent=11 // pred_check_branch
          %593 = sbr.rel (%p591) target = $region40
        $region39: #{tpu_custom_call.1} parent=11 // pred_region
          %s595 = ssub.s32 256, 256
          %596 = vsyncadd [#allocation15], %s595
          %s597 = sshll.u32 [#allocation16], 4
          %s598 = int_to_ptr.vmem [resolvable:$true] %s597
          %603 = dma.hbm_to_vmem [thread:$0]  %s8, 256, %s598, [#allocation15], 64, 64, 4
        $region40: #{tpu_custom_call.1} parent=11 // pred_fallthru
          _
        // Predicated region
        $region41: #{tpu_custom_call.1} parent=11 // pred_check
          %p604 = pneg %p280
        $region42: #{tpu_custom_call.1} parent=11 // pred_check_branch
          %606 = sbr.rel (%p604) target = $region44
        $region43: #{tpu_custom_call.1} parent=11 // pred_region
          %s608 = ssub.s32 16, 16
          %609 = vsyncadd [#allocation18], %s608
          %s611 = sshll.u32 [#allocation17], 4
          %s612 = int_to_ptr.vmem [resolvable:$true] %s611
          %614 = dma.hbm_to_vmem [thread:$0]  %s9, 16, %s612, [#allocation18]
        $region44: #{tpu_custom_call.1} parent=11 // pred_fallthru
          _
        // Predicated region
        $region45: #{tpu_custom_call.1} parent=11 // pred_check
          %p615 = pneg %p301
        $region46: #{tpu_custom_call.1} parent=11 // pred_check_branch
          %617 = sbr.rel (%p615) target = $region48
        $region47: #{tpu_custom_call.1} parent=11 // pred_region
          %s619 = ssub.s32 16, 16
          %620 = vsyncadd [#allocation18], %s619
          %s622 = sshll.u32 [#allocation19], 4
          %s623 = int_to_ptr.vmem [resolvable:$true] %s622
          %625 = dma.hbm_to_vmem [thread:$0]  %s10, 16, %s623, [#allocation18]
        $region48: #{tpu_custom_call.1} parent=11 // pred_fallthru
          _
        // Predicated region
        $region49: #{tpu_custom_call.1} parent=11 // pred_check
          %p626 = pneg %p322
        $region50: #{tpu_custom_call.1} parent=11 // pred_check_branch
          %628 = sbr.rel (%p626) target = $region52
        $region51: #{tpu_custom_call.1} parent=11 // pred_region
          %s630 = ssub.s32 16, 16
          %631 = vsyncadd [#allocation21], %s630
          %s633 = sshll.u32 [#allocation20], 4
          %s634 = int_to_ptr.vmem [resolvable:$true] %s633
          %636 = dma.hbm_to_vmem [thread:$0]  %s11, 16, %s634, [#allocation21]
        $region52: #{tpu_custom_call.1} parent=11 // pred_fallthru
          _
        // Predicated region
        $region53: #{tpu_custom_call.1} parent=11 // pred_check
          %p637 = pneg %p343
        $region54: #{tpu_custom_call.1} parent=11 // pred_check_branch
          %639 = sbr.rel (%p637) target = $region56
        $region55: #{tpu_custom_call.1} parent=11 // pred_region
          %s641 = ssub.s32 16, 16
          %642 = vsyncadd [#allocation21], %s641
          %s644 = sshll.u32 [#allocation22], 4
          %s645 = int_to_ptr.vmem [resolvable:$true] %s644
          %647 = dma.hbm_to_vmem [thread:$0]  %s12, 16, %s645, [#allocation21]
        $region56: #{tpu_custom_call.1} parent=11 // pred_fallthru
          _
        // Predicated region
        $region57: #{tpu_custom_call.1} parent=11 // pred_check
          %p648 = pneg %p364
        $region58: #{tpu_custom_call.1} parent=11 // pred_check_branch
          %650 = sbr.rel (%p648) target = $region60
        $region59: #{tpu_custom_call.1} parent=11 // pred_region
          %s652 = ssub.s32 16, 16
          %653 = vsyncadd [#allocation24], %s652
          %s655 = sshll.u32 [#allocation23], 4
          %s656 = int_to_ptr.vmem [resolvable:$true] %s655
          %658 = dma.hbm_to_vmem [thread:$0]  %s13, 16, %s656, [#allocation24]
        $region60: #{tpu_custom_call.1} parent=11 // pred_fallthru
          _
        // Predicated region
        $region61: #{tpu_custom_call.1} parent=11 // pred_check
          %p659 = pneg %p385
        $region62: #{tpu_custom_call.1} parent=11 // pred_check_branch
          %661 = sbr.rel (%p659) target = $region64
        $region63: #{tpu_custom_call.1} parent=11 // pred_region
          %s663 = ssub.s32 256, 256
          %664 = vsyncadd [#allocation24], %s663
          %s665 = sshll.u32 [#allocation25], 4
          %s666 = int_to_ptr.vmem [resolvable:$true] %s665
          %671 = dma.hbm_to_vmem [thread:$0]  %s14, 256, %s666, [#allocation24], 64, 64, 4
        $region64: #{tpu_custom_call.1} parent=11 // pred_fallthru
          _
        // Predicated region
        $region65: #{tpu_custom_call.1} parent=11 // pred_check
          %p672 = pneg %p406
        $region66: #{tpu_custom_call.1} parent=11 // pred_check_branch
          %674 = sbr.rel (%p672) target = $region68
        $region67: #{tpu_custom_call.1} parent=11 // pred_region
          %s676 = ssub.s32 16, 16
          %677 = vsyncadd [#allocation27], %s676
          %s679 = sshll.u32 [#allocation26], 4
          %s680 = int_to_ptr.vmem [resolvable:$true] %s679
          %682 = dma.hbm_to_vmem [thread:$0]  %s15, 16, %s680, [#allocation27]
        $region68: #{tpu_custom_call.1} parent=11 // pred_fallthru
          _
        // Predicated region
        $region69: #{tpu_custom_call.1} parent=11 // pred_check
          %p683 = pneg %p427
        $region70: #{tpu_custom_call.1} parent=11 // pred_check_branch
          %685 = sbr.rel (%p683) target = $region72
        $region71: #{tpu_custom_call.1} parent=11 // pred_region
          %s687 = ssub.s32 1024, 1024
          %688 = vsyncadd [#allocation27], %s687
          %s689 = sshll.u32 [#allocation28], 4
          %s690 = int_to_ptr.vmem [resolvable:$true] %s689
          %695 = dma.hbm_to_vmem [thread:$0]  %s16, 1024, %s690, [#allocation27], 64, 64, 4
        $region72: #{tpu_custom_call.1} parent=11 // pred_fallthru
          _
        // Predicated region
        $region73: #{tpu_custom_call.1} parent=11 // pred_check
          %p696 = pneg %p448
        $region74: #{tpu_custom_call.1} parent=11 // pred_check_branch
          %698 = sbr.rel (%p696) target = $region76
        $region75: #{tpu_custom_call.1} parent=11 // pred_region
          %s700 = ssub.s32 16, 16
          %701 = vsyncadd [#allocation30], %s700
          %s703 = sshll.u32 [#allocation29], 4
          %s704 = int_to_ptr.vmem [resolvable:$true] %s703
          %706 = dma.hbm_to_vmem [thread:$0]  %s17, 16, %s704, [#allocation30]
        $region76: #{tpu_custom_call.1} parent=11 // pred_fallthru
          _
      $region12: #{tpu_custom_call.1} parent=5 // pred_fallthru
        _
      %p707 = scmp.lt.s32.totalorder %s46, 2
      // Predicated region
      $region77: #{tpu_custom_call.1} parent=5 // pred_check
        %p708 = pneg %p707
      $region78: #{tpu_custom_call.1} parent=5 // pred_check_branch
        %710 = sbr.rel (%p708) target = $region80
      $region79: #{tpu_custom_call.1} parent=5 // pred_region
        // Predicated region
        $region81: #{tpu_custom_call.1} parent=79 // pred_check
          %p711 = pneg %p78
        $region82: #{tpu_custom_call.1} parent=79 // pred_check_branch
          %713 = sbr.rel (%p711) target = $region84
        $region83: #{tpu_custom_call.1} parent=79 // pred_region
          %s714 = sand.u32 %s68, 1
          %s715 = scalar_lea.sflag [#allocation3], %s714
          %s716 = sand.u32 %s68, 1
          %s717 = smul.addr %s716, 8
          %s718 = scalar_lea.vmem [#allocation2], %s717
          %s720 = ssub.s32 128, 128
          %721 = vsyncadd %s715, %s720
          %s722 = smul.addr %s53, 128
          %s723 = scalar_lea.hbm %s0, %s722
          %s725 = sshll.u32 %s718, 4
          %s726 = int_to_ptr.vmem [resolvable:$true] %s725
          %728 = dma.hbm_to_vmem [thread:$0]  %s723, 128, %s726, %s715
        $region84: #{tpu_custom_call.1} parent=79 // pred_fallthru
          _
        // Predicated region
        $region85: #{tpu_custom_call.1} parent=79 // pred_check
          %p729 = pneg %p106
        $region86: #{tpu_custom_call.1} parent=79 // pred_check_branch
          %731 = sbr.rel (%p729) target = $region88
        $region87: #{tpu_custom_call.1} parent=79 // pred_region
          %s732 = sand.u32 %s46, 1
          %s733 = scalar_lea.sflag [#allocation6], %s732
          %s734 = sand.u32 %s96, 1
          %s735 = smul.addr %s734, 8
          %s736 = scalar_lea.vmem [#allocation5], %s735
          %s738 = ssub.s32 128, 128
          %739 = vsyncadd %s733, %s738
          %s740 = sadd.s32 %s54, %s53
          %s741 = smul.addr %s740, 128
          %s742 = scalar_lea.hbm %s1, %s741
          %s744 = sshll.u32 %s736, 4
          %s745 = int_to_ptr.vmem [resolvable:$true] %s744
          %747 = dma.hbm_to_vmem [thread:$0]  %s742, 128, %s745, %s733
        $region88: #{tpu_custom_call.1} parent=79 // pred_fallthru
          _
      $region80: #{tpu_custom_call.1} parent=5 // pred_fallthru
        _
      %p748 = scmp.le.s32.totalorder 1, %s46
      %p749 = scmp.lt.s32.totalorder %s46, 3
      %p750 = pnand %p748, %p749
      %p751 = pneg %p750
      // Predicated region
      $region89: #{tpu_custom_call.1} parent=5 // pred_check
        _
      $region90: #{tpu_custom_call.1} parent=5 // pred_check_branch
        %753 = sbr.rel (%p750) target = $region92
      $region91: #{tpu_custom_call.1} parent=5 // pred_region
        %s754 = ssub.s32 %s46, 1
        %s755 = sand.u32 %s71, 1
        %s756 = scalar_lea.sflag [#allocation3], %s755
        %s757 = sand.u32 %s71, 1
        %s758 = smul.addr %s757, 8
        %s759 = scalar_lea.vmem [#allocation2], %s758
        // Predicated region
        $region93: #{tpu_custom_call.1} parent=91 // pred_check
          %p760 = pneg %p84
        $region94: #{tpu_custom_call.1} parent=91 // pred_check_branch
          %762 = sbr.rel (%p760) target = $region96
        $region95: #{tpu_custom_call.1} parent=91 // pred_region
          %763 = dma.done %s756, 128
        $region96: #{tpu_custom_call.1} parent=91 // pred_fallthru
          _
        %s764 = sand.u32 %s51, 1
        %s765 = scalar_lea.sflag [#allocation6], %s764
        %s766 = sand.u32 %s99, 1
        %s767 = smul.addr %s766, 8
        %s768 = scalar_lea.vmem [#allocation5], %s767
        // Predicated region
        $region97: #{tpu_custom_call.1} parent=91 // pred_check
          %p769 = pneg %p112
        $region98: #{tpu_custom_call.1} parent=91 // pred_check_branch
          %771 = sbr.rel (%p769) target = $region100
        $region99: #{tpu_custom_call.1} parent=91 // pred_region
          %772 = dma.done %s765, 128
        $region100: #{tpu_custom_call.1} parent=91 // pred_fallthru
          _
        // Predicated region
        $region101: #{tpu_custom_call.1} parent=91 // pred_check
          %p773 = pneg %p133
        $region102: #{tpu_custom_call.1} parent=91 // pred_check_branch
          %775 = sbr.rel (%p773) target = $region104
        $region103: #{tpu_custom_call.1} parent=91 // pred_region
          %776 = dma.done [#allocation6], 256
        $region104: #{tpu_custom_call.1} parent=91 // pred_fallthru
          _
        // Predicated region
        $region105: #{tpu_custom_call.1} parent=91 // pred_check
          %p777 = pneg %p154
        $region106: #{tpu_custom_call.1} parent=91 // pred_check_branch
          %779 = sbr.rel (%p777) target = $region108
        $region107: #{tpu_custom_call.1} parent=91 // pred_region
          %780 = dma.done [#allocation9], 16
        $region108: #{tpu_custom_call.1} parent=91 // pred_fallthru
          _
        // Predicated region
        $region109: #{tpu_custom_call.1} parent=91 // pred_check
          %p781 = pneg %p175
        $region110: #{tpu_custom_call.1} parent=91 // pred_check_branch
          %783 = sbr.rel (%p781) target = $region112
        $region111: #{tpu_custom_call.1} parent=91 // pred_region
          %784 = dma.done [#allocation9], 256
        $region112: #{tpu_custom_call.1} parent=91 // pred_fallthru
          _
        // Predicated region
        $region113: #{tpu_custom_call.1} parent=91 // pred_check
          %p785 = pneg %p196
        $region114: #{tpu_custom_call.1} parent=91 // pred_check_branch
          %787 = sbr.rel (%p785) target = $region116
        $region115: #{tpu_custom_call.1} parent=91 // pred_region
          %788 = dma.done [#allocation12], 16
        $region116: #{tpu_custom_call.1} parent=91 // pred_fallthru
          _
        // Predicated region
        $region117: #{tpu_custom_call.1} parent=91 // pred_check
          %p789 = pneg %p217
        $region118: #{tpu_custom_call.1} parent=91 // pred_check_branch
          %791 = sbr.rel (%p789) target = $region120
        $region119: #{tpu_custom_call.1} parent=91 // pred_region
          %792 = dma.done [#allocation12], 256
        $region120: #{tpu_custom_call.1} parent=91 // pred_fallthru
          _
        // Predicated region
        $region121: #{tpu_custom_call.1} parent=91 // pred_check
          %p793 = pneg %p238
        $region122: #{tpu_custom_call.1} parent=91 // pred_check_branch
          %795 = sbr.rel (%p793) target = $region124
        $region123: #{tpu_custom_call.1} parent=91 // pred_region
          %796 = dma.done [#allocation15], 16
        $region124: #{tpu_custom_call.1} parent=91 // pred_fallthru
          _
        // Predicated region
        $region125: #{tpu_custom_call.1} parent=91 // pred_check
          %p797 = pneg %p259
        $region126: #{tpu_custom_call.1} parent=91 // pred_check_branch
          %799 = sbr.rel (%p797) target = $region128
        $region127: #{tpu_custom_call.1} parent=91 // pred_region
          %800 = dma.done [#allocation15], 256
        $region128: #{tpu_custom_call.1} parent=91 // pred_fallthru
          _
        // Predicated region
        $region129: #{tpu_custom_call.1} parent=91 // pred_check
          %p801 = pneg %p280
        $region130: #{tpu_custom_call.1} parent=91 // pred_check_branch
          %803 = sbr.rel (%p801) target = $region132
        $region131: #{tpu_custom_call.1} parent=91 // pred_region
          %804 = dma.done [#allocation18], 16
        $region132: #{tpu_custom_call.1} parent=91 // pred_fallthru
          _
        // Predicated region
        $region133: #{tpu_custom_call.1} parent=91 // pred_check
          %p805 = pneg %p301
        $region134: #{tpu_custom_call.1} parent=91 // pred_check_branch
          %807 = sbr.rel (%p805) target = $region136
        $region135: #{tpu_custom_call.1} parent=91 // pred_region
          %808 = dma.done [#allocation18], 16
        $region136: #{tpu_custom_call.1} parent=91 // pred_fallthru
          _
        // Predicated region
        $region137: #{tpu_custom_call.1} parent=91 // pred_check
          %p809 = pneg %p322
        $region138: #{tpu_custom_call.1} parent=91 // pred_check_branch
          %811 = sbr.rel (%p809) target = $region140
        $region139: #{tpu_custom_call.1} parent=91 // pred_region
          %812 = dma.done [#allocation21], 16
        $region140: #{tpu_custom_call.1} parent=91 // pred_fallthru
          _
        // Predicated region
        $region141: #{tpu_custom_call.1} parent=91 // pred_check
          %p813 = pneg %p343
        $region142: #{tpu_custom_call.1} parent=91 // pred_check_branch
          %815 = sbr.rel (%p813) target = $region144
        $region143: #{tpu_custom_call.1} parent=91 // pred_region
          %816 = dma.done [#allocation21], 16
        $region144: #{tpu_custom_call.1} parent=91 // pred_fallthru
          _
        // Predicated region
        $region145: #{tpu_custom_call.1} parent=91 // pred_check
          %p817 = pneg %p364
        $region146: #{tpu_custom_call.1} parent=91 // pred_check_branch
          %819 = sbr.rel (%p817) target = $region148
        $region147: #{tpu_custom_call.1} parent=91 // pred_region
          %820 = dma.done [#allocation24], 16
        $region148: #{tpu_custom_call.1} parent=91 // pred_fallthru
          _
        // Predicated region
        $region149: #{tpu_custom_call.1} parent=91 // pred_check
          %p821 = pneg %p385
        $region150: #{tpu_custom_call.1} parent=91 // pred_check_branch
          %823 = sbr.rel (%p821) target = $region152
        $region151: #{tpu_custom_call.1} parent=91 // pred_region
          %824 = dma.done [#allocation24], 256
        $region152: #{tpu_custom_call.1} parent=91 // pred_fallthru
          _
        // Predicated region
        $region153: #{tpu_custom_call.1} parent=91 // pred_check
          %p825 = pneg %p406
        $region154: #{tpu_custom_call.1} parent=91 // pred_check_branch
          %827 = sbr.rel (%p825) target = $region156
        $region155: #{tpu_custom_call.1} parent=91 // pred_region
          %828 = dma.done [#allocation27], 16
        $region156: #{tpu_custom_call.1} parent=91 // pred_fallthru
          _
        // Predicated region
        $region157: #{tpu_custom_call.1} parent=91 // pred_check
          %p829 = pneg %p427
        $region158: #{tpu_custom_call.1} parent=91 // pred_check_branch
          %831 = sbr.rel (%p829) target = $region160
        $region159: #{tpu_custom_call.1} parent=91 // pred_region
          %832 = dma.done [#allocation27], 1024
        $region160: #{tpu_custom_call.1} parent=91 // pred_fallthru
          _
        // Predicated region
        $region161: #{tpu_custom_call.1} parent=91 // pred_check
          %p833 = pneg %p448
        $region162: #{tpu_custom_call.1} parent=91 // pred_check_branch
          %835 = sbr.rel (%p833) target = $region164
        $region163: #{tpu_custom_call.1} parent=91 // pred_region
          %836 = dma.done [#allocation30], 16
        $region164: #{tpu_custom_call.1} parent=91 // pred_fallthru
          _
        %s837 = sand.u32 %s71, 1
        %s838 = scalar_lea.sflag [#allocation3], %s837
        %s839 = sand.u32 %s71, 1
        %s840 = smul.addr %s839, 8
        %s841 = scalar_lea.vmem [#allocation2], %s840
        %p842 = pneg %p84
        %p843 = pneg %p81
        %s844 = sand.u32 %s51, 1
        %s845 = scalar_lea.sflag [#allocation6], %s844
        %s846 = sand.u32 %s99, 1
        %s847 = smul.addr %s846, 8
        %s848 = scalar_lea.vmem [#allocation5], %s847
        %p849 = pneg %p112
        %p850 = pneg %p109
        %p851 = pneg %p133
        %p852 = pneg %p130
        %p853 = pneg %p154
        %p854 = pneg %p151
        %p855 = pneg %p175
        %p856 = pneg %p172
        %p857 = pneg %p196
        %p858 = pneg %p193
        %p859 = pneg %p217
        %p860 = pneg %p214
        %p861 = pneg %p238
        %p862 = pneg %p235
        %p863 = pneg %p259
        %p864 = pneg %p256
        %p865 = pneg %p280
        %p866 = pneg %p277
        %p867 = pneg %p301
        %p868 = pneg %p298
        %p869 = pneg %p322
        %p870 = pneg %p319
        %p871 = pneg %p343
        %p872 = pneg %p340
        %p873 = pneg %p364
        %p874 = pneg %p361
        %p875 = pneg %p385
        %p876 = pneg %p382
        %p877 = pneg %p406
        %p878 = pneg %p403
        %p879 = pneg %p427
        %p880 = pneg %p424
        %p881 = pneg %p448
        %p882 = pneg %p445
        %p883 = pneg %p476
        %p884 = pneg %p473
        %s885 = sand.u32 %s463, 1
        %s886 = scalar_lea.sflag [#allocation4], %s885
        %s887 = sand.u32 %s463, 1
        %s888 = smul.addr %s887, 8
        %s889 = scalar_lea.vmem [#allocation31], %s888
        %p890 = pneg %p504
        %p891 = pneg %p501
        %s892 = sand.u32 %s491, 1
        %s893 = scalar_lea.sflag [#allocation33], %s892
        %s894 = sand.u32 %s491, 1
        %s895 = smul.addr %s894, 32
        %s896 = scalar_lea.vmem [#allocation32], %s895
        %v898 = vld [vmem:[%s759] sm:$0xff]
        %v899 = vpack.c.bf16 %v898, %v898
        %v900 = vld [vmem:[#allocation7] sm:$0xf]
        %v901 = vld [vmem:[#allocation7 + $0x4] sm:$0xf]
        %v902 = vld [vmem:[#allocation7 + $0x8] sm:$0xf]
        %v903 = vld [vmem:[#allocation7 + $0xc] sm:$0xf]
        %v904 = vld [vmem:[#allocation8] sm:$0x1]
        %v906 = vlaneseq
        %v907 = vshrl.u32 %v906, 7
        %v908 = vsub.s32 0, %v907
        %v909 = vrot.slane %v904, %v908
        %v915 = vunpack.c.l.b16 %v900
        %v916 = vunpack.c.l.b16 %v901
        %v917 = vunpack.c.l.b16 %v902
        %v918 = vunpack.c.l.b16 %v903
        %v919 = vpack.c.b16 %v916, %v915
        %v920 = vpack.c.b16 %v918, %v917
        %vm923 = vcmask 261120
        %v925 = vsel %vm923, %v899, 0
        %927 = vmatprep.subr.bf16.mxu0 0
        %928 = vmatpush1.bf16.msra.mxu0 %v919
        %929 = vmatprep.subr.bf16.mxu0 0
        %930 = vmatpush1.bf16.msra.mxu0 %v920
        %931 = vmatprep.subr.bf16.mxu0 0
        %932 = vmatpush1.bf16.msra.mxu0 0
        %933 = vmatprep.subr.bf16.mxu0 0
        %934 = vmatpush1.bf16.msra.mxu0 0
        %935 = vmatprep.subr.bf16.mxu0 0
        %936 = vmatpush1.bf16.msra.mxu0 0
        %937 = vmatprep.subr.bf16.mxu0 0
        %938 = vmatpush1.bf16.msra.mxu0 0
        %939 = vmatprep.subr.bf16.mxu0 0
        %940 = vmatpush1.bf16.msra.mxu0 0
        %941 = vmatprep.subr.bf16.mxu0 0
        %942 = vmatpush1.bf16.msra.mxu0 0
        %943 = vmatprep.subr.bf16.mxu0 0
        %944 = vmatpush1.bf16.msra.mxu0 0
        %945 = vmatprep.subr.bf16.mxu0 0
        %946 = vmatpush1.bf16.msra.mxu0 0
        %947 = vmatprep.subr.bf16.mxu0 0
        %948 = vmatpush1.bf16.msra.mxu0 0
        %949 = vmatprep.subr.bf16.mxu0 0
        %950 = vmatpush1.bf16.msra.mxu0 0
        %951 = vmatprep.subr.bf16.mxu0 0
        %952 = vmatpush1.bf16.msra.mxu0 0
        %953 = vmatprep.subr.bf16.mxu0 0
        %954 = vmatpush1.bf16.msra.mxu0 0
        %955 = vmatprep.subr.bf16.mxu0 0
        %956 = vmatpush1.bf16.msra.mxu0 0
        %957 = vmatprep.subr.bf16.mxu0 0
        %958 = vmatpush1.bf16.msra.mxu0 0
        %959 = vmatprep.mubr.bf16.mxu0 0
        %960 = vmatmul.mubr.bf16.gmra.mrb[0].mxu0 %v925
        %v961 = vpop.f32.mrb[0].mxu0
        %v962 = vadd.f32 %v909, %v961
        %v963 = vpop.f32.mrb[0].mxu0
        %v964 = vpop.f32.mrb[0].mxu0
        %v965 = vpop.f32.mrb[0].mxu0
        %966 = vdwg.mxu0
        %v967 = vld [vmem:[#allocation10] sm:$0xf]
        %v968 = vld [vmem:[#allocation10 + $0x4] sm:$0xf]
        %v969 = vld [vmem:[#allocation10 + $0x8] sm:$0xf]
        %v970 = vld [vmem:[#allocation10 + $0xc] sm:$0xf]
        %v971 = vld [vmem:[#allocation11] sm:$0x1]
        %v973 = vlaneseq
        %v974 = vshrl.u32 %v973, 7
        %v975 = vsub.s32 0, %v974
        %v976 = vrot.slane %v971, %v975
        %v982 = vunpack.c.l.b16 %v967
        %v983 = vunpack.c.l.b16 %v968
        %v984 = vunpack.c.l.b16 %v969
        %v985 = vunpack.c.l.b16 %v970
        %v986 = vpack.c.b16 %v983, %v982
        %v987 = vpack.c.b16 %v985, %v984
        %990 = vmatprep.subr.bf16.mxu0 0
        %991 = vmatpush1.bf16.msra.mxu0 %v986
        %992 = vmatprep.subr.bf16.mxu0 0
        %993 = vmatpush1.bf16.msra.mxu0 %v987
        %994 = vmatprep.subr.bf16.mxu0 0
        %995 = vmatpush1.bf16.msra.mxu0 0
        %996 = vmatprep.subr.bf16.mxu0 0
        %997 = vmatpush1.bf16.msra.mxu0 0
        %998 = vmatprep.subr.bf16.mxu0 0
        %999 = vmatpush1.bf16.msra.mxu0 0
        %1000 = vmatprep.subr.bf16.mxu0 0
        %1001 = vmatpush1.bf16.msra.mxu0 0
        %1002 = vmatprep.subr.bf16.mxu0 0
        %1003 = vmatpush1.bf16.msra.mxu0 0
        %1004 = vmatprep.subr.bf16.mxu0 0
        %1005 = vmatpush1.bf16.msra.mxu0 0
        %1006 = vmatprep.subr.bf16.mxu0 0
        %1007 = vmatpush1.bf16.msra.mxu0 0
        %1008 = vmatprep.subr.bf16.mxu0 0
        %1009 = vmatpush1.bf16.msra.mxu0 0
        %1010 = vmatprep.subr.bf16.mxu0 0
        %1011 = vmatpush1.bf16.msra.mxu0 0
        %1012 = vmatprep.subr.bf16.mxu0 0
        %1013 = vmatpush1.bf16.msra.mxu0 0
        %1014 = vmatprep.subr.bf16.mxu0 0
        %1015 = vmatpush1.bf16.msra.mxu0 0
        %1016 = vmatprep.subr.bf16.mxu0 0
        %1017 = vmatpush1.bf16.msra.mxu0 0
        %1018 = vmatprep.subr.bf16.mxu0 0
        %1019 = vmatpush1.bf16.msra.mxu0 0
        %1020 = vmatprep.subr.bf16.mxu0 0
        %1021 = vmatpush1.bf16.msra.mxu0 0
        %1022 = vmatprep.mubr.bf16.mxu0 0
        %1023 = vmatmul.mubr.bf16.gmra.mrb[0].mxu0 %v925
        %v1024 = vpop.f32.mrb[0].mxu0
        %v1025 = vadd.f32 %v976, %v1024
        %v1026 = vpop.f32.mrb[0].mxu0
        %v1027 = vpop.f32.mrb[0].mxu0
        %v1028 = vpop.f32.mrb[0].mxu0
        %1029 = vdwg.mxu0
        %v1030 = vld [vmem:[#allocation13] sm:$0xf]
        %v1031 = vld [vmem:[#allocation13 + $0x4] sm:$0xf]
        %v1032 = vld [vmem:[#allocation13 + $0x8] sm:$0xf]
        %v1033 = vld [vmem:[#allocation13 + $0xc] sm:$0xf]
        %v1034 = vld [vmem:[#allocation14] sm:$0x1]
        %v1036 = vlaneseq
        %v1037 = vshrl.u32 %v1036, 7
        %v1038 = vsub.s32 0, %v1037
        %v1039 = vrot.slane %v1034, %v1038
        %v1045 = vunpack.c.l.b16 %v1030
        %v1046 = vunpack.c.l.b16 %v1031
        %v1047 = vunpack.c.l.b16 %v1032
        %v1048 = vunpack.c.l.b16 %v1033
        %v1049 = vpack.c.b16 %v1046, %v1045
        %v1050 = vpack.c.b16 %v1048, %v1047
        %1053 = vmatprep.subr.bf16.mxu0 0
        %1054 = vmatpush1.bf16.msra.mxu0 %v1049
        %1055 = vmatprep.subr.bf16.mxu0 0
        %1056 = vmatpush1.bf16.msra.mxu0 %v1050
        %1057 = vmatprep.subr.bf16.mxu0 0
        %1058 = vmatpush1.bf16.msra.mxu0 0
        %1059 = vmatprep.subr.bf16.mxu0 0
        %1060 = vmatpush1.bf16.msra.mxu0 0
        %1061 = vmatprep.subr.bf16.mxu0 0
        %1062 = vmatpush1.bf16.msra.mxu0 0
        %1063 = vmatprep.subr.bf16.mxu0 0
        %1064 = vmatpush1.bf16.msra.mxu0 0
        %1065 = vmatprep.subr.bf16.mxu0 0
        %1066 = vmatpush1.bf16.msra.mxu0 0
        %1067 = vmatprep.subr.bf16.mxu0 0
        %1068 = vmatpush1.bf16.msra.mxu0 0
        %1069 = vmatprep.subr.bf16.mxu0 0
        %1070 = vmatpush1.bf16.msra.mxu0 0
        %1071 = vmatprep.subr.bf16.mxu0 0
        %1072 = vmatpush1.bf16.msra.mxu0 0
        %1073 = vmatprep.subr.bf16.mxu0 0
        %1074 = vmatpush1.bf16.msra.mxu0 0
        %1075 = vmatprep.subr.bf16.mxu0 0
        %1076 = vmatpush1.bf16.msra.mxu0 0
        %1077 = vmatprep.subr.bf16.mxu0 0
        %1078 = vmatpush1.bf16.msra.mxu0 0
        %1079 = vmatprep.subr.bf16.mxu0 0
        %1080 = vmatpush1.bf16.msra.mxu0 0
        %1081 = vmatprep.subr.bf16.mxu0 0
        %1082 = vmatpush1.bf16.msra.mxu0 0
        %1083 = vmatprep.subr.bf16.mxu0 0
        %1084 = vmatpush1.bf16.msra.mxu0 0
        %1085 = vmatprep.mubr.bf16.mxu0 0
        %1086 = vmatmul.mubr.bf16.gmra.mrb[0].mxu0 %v925
        %v1087 = vpop.f32.mrb[0].mxu0
        %v1088 = vadd.f32 %v1039, %v1087
        %v1089 = vpop.f32.mrb[0].mxu0
        %v1090 = vpop.f32.mrb[0].mxu0
        %v1091 = vpop.f32.mrb[0].mxu0
        %1092 = vdwg.mxu0
        %v1093 = vpack.c.bf16 %v962, %v962
        %v1094 = vpack.c.bf16 %v1025, %v1025
        %v1095 = vpack.c.bf16 %v1088, %v1088
        %1097 = vrot.lane.b32.xlu0 %v1093, 120
        %v1098 = vpop.permute.xlu0 %1097
        %1099 = vrot.lane.b32.xlu0 %v1093, 112
        %v1100 = vpop.permute.xlu0 %1099
        %1101 = vrot.lane.b32.xlu0 %v1093, 104
        %v1102 = vpop.permute.xlu0 %1101
        %1104 = vrot.lane.b32.xlu0 %v1094, 120
        %v1105 = vpop.permute.xlu0 %1104
        %1106 = vrot.lane.b32.xlu0 %v1094, 112
        %v1107 = vpop.permute.xlu0 %1106
        %1108 = vrot.lane.b32.xlu0 %v1094, 104
        %v1109 = vpop.permute.xlu0 %1108
        %1111 = vrot.lane.b32.xlu0 %v1095, 120
        %v1112 = vpop.permute.xlu0 %1111
        %1113 = vrot.lane.b32.xlu0 %v1095, 112
        %v1114 = vpop.permute.xlu0 %1113
        %1115 = vrot.lane.b32.xlu0 %v1095, 104
        %v1116 = vpop.permute.xlu0 %1115
        %v1117 = vld [vmem:[%s768] sm:$0xff]
        %vm1118 = vcmp.eq.f32.partialorder %v1117, 0.0
        %v1119 = vsel %vm1118, -1e+09, 0.0
        %vm1120 = vcmask 64512
        %v1122 = vsel %vm1120, %v1093, 0
        %v1125 = vsel %vm1120, %v1094, 0
        %1127 = vmatprep.subr.bf16.mxu0 0
        %1128 = vmatpush1.bf16.xpose.msra.mxu0 %v1125
        %1129 = vmatprep.subr.bf16.mxu0 0
        %1130 = vmatpush1.bf16.xpose.msra.mxu0 0
        %1131 = vmatprep.subr.bf16.mxu0 0
        %1132 = vmatpush1.bf16.xpose.msra.mxu0 0
        %1133 = vmatprep.subr.bf16.mxu0 0
        %1134 = vmatpush1.bf16.xpose.msra.mxu0 0
        %1135 = vmatprep.subr.bf16.mxu0 0
        %1136 = vmatpush1.bf16.xpose.msra.mxu0 0
        %1137 = vmatprep.subr.bf16.mxu0 0
        %1138 = vmatpush1.bf16.xpose.msra.mxu0 0
        %1139 = vmatprep.subr.bf16.mxu0 0
        %1140 = vmatpush1.bf16.xpose.msra.mxu0 0
        %1141 = vmatprep.subr.bf16.mxu0 0
        %1142 = vmatpush1.bf16.xpose.msra.mxu0 0
        %1143 = vmatprep.subr.bf16.mxu0 0
        %1144 = vmatpush1.bf16.xpose.msra.mxu0 0
        %1145 = vmatprep.subr.bf16.mxu0 0
        %1146 = vmatpush1.bf16.xpose.msra.mxu0 0
        %1147 = vmatprep.subr.bf16.mxu0 0
        %1148 = vmatpush1.bf16.xpose.msra.mxu0 0
        %1149 = vmatprep.subr.bf16.mxu0 0
        %1150 = vmatpush1.bf16.xpose.msra.mxu0 0
        %1151 = vmatprep.subr.bf16.mxu0 0
        %1152 = vmatpush1.bf16.xpose.msra.mxu0 0
        %1153 = vmatprep.subr.bf16.mxu0 0
        %1154 = vmatpush1.bf16.xpose.msra.mxu0 0
        %1155 = vmatprep.subr.bf16.mxu0 0
        %1156 = vmatpush1.bf16.xpose.msra.mxu0 0
        %1157 = vmatprep.subr.bf16.mxu0 0
        %1158 = vmatpush1.bf16.xpose.msra.mxu0 0
        %1159 = vmatprep.mubr.bf16.mxu0 0
        %1160 = vmatmul.mubr.bf16.gmra.mrb[0].mxu0 %v1122
        %v1161 = vpop.f32.mrb[0].mxu0
        %v1162 = vadd.f32 0.0, %v1161
        %v1163 = vpop.f32.mrb[0].mxu0
        %v1164 = vpop.f32.mrb[0].mxu0
        %v1165 = vpop.f32.mrb[0].mxu0
        %1166 = vdwg.mxu0
        %v1168 = vsel %vm1120, %v1098, 0
        %v1171 = vsel %vm1120, %v1105, 0
        %1173 = vmatprep.subr.bf16.mxu0 0
        %1174 = vmatpush1.bf16.xpose.msra.mxu0 %v1171
        %1175 = vmatprep.subr.bf16.mxu0 0
        %1176 = vmatpush1.bf16.xpose.msra.mxu0 0
        %1177 = vmatprep.subr.bf16.mxu0 0
        %1178 = vmatpush1.bf16.xpose.msra.mxu0 0
        %1179 = vmatprep.subr.bf16.mxu0 0
        %1180 = vmatpush1.bf16.xpose.msra.mxu0 0
        %1181 = vmatprep.subr.bf16.mxu0 0
        %1182 = vmatpush1.bf16.xpose.msra.mxu0 0
        %1183 = vmatprep.subr.bf16.mxu0 0
        %1184 = vmatpush1.bf16.xpose.msra.mxu0 0
        %1185 = vmatprep.subr.bf16.mxu0 0
        %1186 = vmatpush1.bf16.xpose.msra.mxu0 0
        %1187 = vmatprep.subr.bf16.mxu0 0
        %1188 = vmatpush1.bf16.xpose.msra.mxu0 0
        %1189 = vmatprep.subr.bf16.mxu0 0
        %1190 = vmatpush1.bf16.xpose.msra.mxu0 0
        %1191 = vmatprep.subr.bf16.mxu0 0
        %1192 = vmatpush1.bf16.xpose.msra.mxu0 0
        %1193 = vmatprep.subr.bf16.mxu0 0
        %1194 = vmatpush1.bf16.xpose.msra.mxu0 0
        %1195 = vmatprep.subr.bf16.mxu0 0
        %1196 = vmatpush1.bf16.xpose.msra.mxu0 0
        %1197 = vmatprep.subr.bf16.mxu0 0
        %1198 = vmatpush1.bf16.xpose.msra.mxu0 0
        %1199 = vmatprep.subr.bf16.mxu0 0
        %1200 = vmatpush1.bf16.xpose.msra.mxu0 0
        %1201 = vmatprep.subr.bf16.mxu0 0
        %1202 = vmatpush1.bf16.xpose.msra.mxu0 0
        %1203 = vmatprep.subr.bf16.mxu0 0
        %1204 = vmatpush1.bf16.xpose.msra.mxu0 0
        %1205 = vmatprep.mubr.bf16.mxu0 0
        %1206 = vmatmul.mubr.bf16.gmra.mrb[0].mxu0 %v1168
        %v1207 = vpop.f32.mrb[0].mxu0
        %v1208 = vadd.f32 0.0, %v1207
        %v1209 = vpop.f32.mrb[0].mxu0
        %v1210 = vpop.f32.mrb[0].mxu0
        %v1211 = vpop.f32.mrb[0].mxu0
        %1212 = vdwg.mxu0
        %v1214 = vsel %vm1120, %v1100, 0
        %v1217 = vsel %vm1120, %v1107, 0
        %1219 = vmatprep.subr.bf16.mxu0 0
        %1220 = vmatpush1.bf16.xpose.msra.mxu0 %v1217
        %1221 = vmatprep.subr.bf16.mxu0 0
        %1222 = vmatpush1.bf16.xpose.msra.mxu0 0
        %1223 = vmatprep.subr.bf16.mxu0 0
        %1224 = vmatpush1.bf16.xpose.msra.mxu0 0
        %1225 = vmatprep.subr.bf16.mxu0 0
        %1226 = vmatpush1.bf16.xpose.msra.mxu0 0
        %1227 = vmatprep.subr.bf16.mxu0 0
        %1228 = vmatpush1.bf16.xpose.msra.mxu0 0
        %1229 = vmatprep.subr.bf16.mxu0 0
        %1230 = vmatpush1.bf16.xpose.msra.mxu0 0
        %1231 = vmatprep.subr.bf16.mxu0 0
        %1232 = vmatpush1.bf16.xpose.msra.mxu0 0
        %1233 = vmatprep.subr.bf16.mxu0 0
        %1234 = vmatpush1.bf16.xpose.msra.mxu0 0
        %1235 = vmatprep.subr.bf16.mxu0 0
        %1236 = vmatpush1.bf16.xpose.msra.mxu0 0
        %1237 = vmatprep.subr.bf16.mxu0 0
        %1238 = vmatpush1.bf16.xpose.msra.mxu0 0
        %1239 = vmatprep.subr.bf16.mxu0 0
        %1240 = vmatpush1.bf16.xpose.msra.mxu0 0
        %1241 = vmatprep.subr.bf16.mxu0 0
        %1242 = vmatpush1.bf16.xpose.msra.mxu0 0
        %1243 = vmatprep.subr.bf16.mxu0 0
        %1244 = vmatpush1.bf16.xpose.msra.mxu0 0
        %1245 = vmatprep.subr.bf16.mxu0 0
        %1246 = vmatpush1.bf16.xpose.msra.mxu0 0
        %1247 = vmatprep.subr.bf16.mxu0 0
        %1248 = vmatpush1.bf16.xpose.msra.mxu0 0
        %1249 = vmatprep.subr.bf16.mxu0 0
        %1250 = vmatpush1.bf16.xpose.msra.mxu0 0
        %1251 = vmatprep.mubr.bf16.mxu0 0
        %1252 = vmatmul.mubr.bf16.gmra.mrb[0].mxu0 %v1214
        %v1253 = vpop.f32.mrb[0].mxu0
        %v1254 = vadd.f32 0.0, %v1253
        %v1255 = vpop.f32.mrb[0].mxu0
        %v1256 = vpop.f32.mrb[0].mxu0
        %v1257 = vpop.f32.mrb[0].mxu0
        %1258 = vdwg.mxu0
        %v1260 = vsel %vm1120, %v1102, 0
        %v1263 = vsel %vm1120, %v1109, 0
        %1265 = vmatprep.subr.bf16.mxu0 0
        %1266 = vmatpush1.bf16.xpose.msra.mxu0 %v1263
        %1267 = vmatprep.subr.bf16.mxu0 0
        %1268 = vmatpush1.bf16.xpose.msra.mxu0 0
        %1269 = vmatprep.subr.bf16.mxu0 0
        %1270 = vmatpush1.bf16.xpose.msra.mxu0 0
        %1271 = vmatprep.subr.bf16.mxu0 0
        %1272 = vmatpush1.bf16.xpose.msra.mxu0 0
        %1273 = vmatprep.subr.bf16.mxu0 0
        %1274 = vmatpush1.bf16.xpose.msra.mxu0 0
        %1275 = vmatprep.subr.bf16.mxu0 0
        %1276 = vmatpush1.bf16.xpose.msra.mxu0 0
        %1277 = vmatprep.subr.bf16.mxu0 0
        %1278 = vmatpush1.bf16.xpose.msra.mxu0 0
        %1279 = vmatprep.subr.bf16.mxu0 0
        %1280 = vmatpush1.bf16.xpose.msra.mxu0 0
        %1281 = vmatprep.subr.bf16.mxu0 0
        %1282 = vmatpush1.bf16.xpose.msra.mxu0 0
        %1283 = vmatprep.subr.bf16.mxu0 0
        %1284 = vmatpush1.bf16.xpose.msra.mxu0 0
        %1285 = vmatprep.subr.bf16.mxu0 0
        %1286 = vmatpush1.bf16.xpose.msra.mxu0 0
        %1287 = vmatprep.subr.bf16.mxu0 0
        %1288 = vmatpush1.bf16.xpose.msra.mxu0 0
        %1289 = vmatprep.subr.bf16.mxu0 0
        %1290 = vmatpush1.bf16.xpose.msra.mxu0 0
        %1291 = vmatprep.subr.bf16.mxu0 0
        %1292 = vmatpush1.bf16.xpose.msra.mxu0 0
        %1293 = vmatprep.subr.bf16.mxu0 0
        %1294 = vmatpush1.bf16.xpose.msra.mxu0 0
        %1295 = vmatprep.subr.bf16.mxu0 0
        %1296 = vmatpush1.bf16.xpose.msra.mxu0 0
        %1297 = vmatprep.mubr.bf16.mxu0 0
        %1298 = vmatmul.mubr.bf16.gmra.mrb[0].mxu0 %v1260
        %v1299 = vpop.f32.mrb[0].mxu0
        %v1300 = vadd.f32 0.0, %v1299
        %v1301 = vpop.f32.mrb[0].mxu0
        %v1302 = vpop.f32.mrb[0].mxu0
        %v1303 = vpop.f32.mrb[0].mxu0
        %1304 = vdwg.mxu0
        %v1305 = vmul.f32 %v1162, 0.35355338
        %v1306 = vmul.f32 %v1208, 0.35355338
        %v1307 = vmul.f32 %v1254, 0.35355338
        %v1308 = vmul.f32 %v1300, 0.35355338
        %v1309 = vadd.f32 %v1305, %v1119
        %v1310 = vadd.f32 %v1306, %v1119
        %v1311 = vadd.f32 %v1307, %v1119
        %v1312 = vadd.f32 %v1308, %v1119
        %v1313 = vsel %vm1120, %v1309, -inf
        %1314 = vmax.xlane.f32.xlu0 %v1313
        %v1315 = vpop.xlane.xlu0 %1314
        %v1316 = vsel %vm1120, %v1310, -inf
        %1317 = vmax.xlane.f32.xlu0 %v1316
        %v1318 = vpop.xlane.xlu0 %1317
        %v1319 = vsel %vm1120, %v1311, -inf
        %1320 = vmax.xlane.f32.xlu0 %v1319
        %v1321 = vpop.xlane.xlu0 %1320
        %v1322 = vsel %vm1120, %v1312, -inf
        %1323 = vmax.xlane.f32.xlu0 %v1322
        %v1324 = vpop.xlane.xlu0 %1323
        %v1325 = vsub.f32 %v1309, %v1315
        %v1326 = vsub.f32 %v1310, %v1318
        %v1327 = vsub.f32 %v1311, %v1321
        %v1328 = vsub.f32 %v1312, %v1324
        %v1329 = vmul.f32 %v1325, 1.442695
        %v1330 = vpow.pop %v1329
        %v1331 = vmul.f32 %v1326, 1.442695
        %v1332 = vpow.pop %v1331
        %v1333 = vmul.f32 %v1327, 1.442695
        %v1334 = vpow.pop %v1333
        %v1335 = vmul.f32 %v1328, 1.442695
        %v1336 = vpow.pop %v1335
        %v1337 = vsel %vm1120, %v1330, 0.0
        %1338 = vadd.xlane.f32.xlu0 %v1337
        %v1339 = vpop.xlane.xlu0 %1338
        %v1340 = vsel %vm1120, %v1332, 0.0
        %1341 = vadd.xlane.f32.xlu0 %v1340
        %v1342 = vpop.xlane.xlu0 %1341
        %v1343 = vsel %vm1120, %v1334, 0.0
        %1344 = vadd.xlane.f32.xlu0 %v1343
        %v1345 = vpop.xlane.xlu0 %1344
        %v1346 = vsel %vm1120, %v1336, 0.0
        %1347 = vadd.xlane.f32.xlu0 %v1346
        %v1348 = vpop.xlane.xlu0 %1347
        %v1349 = vrcp.pop %v1339
        %v1350 = vrcp.pop %v1342
        %v1351 = vrcp.pop %v1345
        %v1352 = vrcp.pop %v1348
        %v1353 = vmul.f32 %v1330, %v1349
        %v1354 = vmul.f32 %v1332, %v1350
        %v1355 = vmul.f32 %v1334, %v1351
        %v1356 = vmul.f32 %v1336, %v1352
        %1357 = vst.msk [vmem:[%s896] sm:$0xff] %vm1120, %v1353
        %1358 = vst.msk [vmem:[%s896 + $0x8] sm:$0xff] %vm1120, %v1354
        %1359 = vst.msk [vmem:[%s896 + $0x10] sm:$0xff] %vm1120, %v1355
        %1360 = vst.msk [vmem:[%s896 + $0x18] sm:$0xff] %vm1120, %v1356
        %v1361 = vpack.c.bf16 %v1353, %v1353
        %v1362 = vpack.c.bf16 %v1354, %v1354
        %v1363 = vpack.c.bf16 %v1355, %v1355
        %v1364 = vpack.c.bf16 %v1356, %v1356
        %v1366 = vsel %vm1120, %v1361, 0
        %vm1368 = vcmask 1043456
        %v1370 = vsel %vm1368, %v1095, 0
        %1372 = vmatprep.subr.bf16.mxu0 0
        %1373 = vmatpush1.bf16.msra.mxu0 %v1370
        %1374 = vmatprep.subr.bf16.mxu0 0
        %1375 = vmatpush1.bf16.msra.mxu0 0
        %1376 = vmatprep.subr.bf16.mxu0 0
        %1377 = vmatpush1.bf16.msra.mxu0 0
        %1378 = vmatprep.subr.bf16.mxu0 0
        %1379 = vmatpush1.bf16.msra.mxu0 0
        %1380 = vmatprep.subr.bf16.mxu0 0
        %1381 = vmatpush1.bf16.msra.mxu0 0
        %1382 = vmatprep.subr.bf16.mxu0 0
        %1383 = vmatpush1.bf16.msra.mxu0 0
        %1384 = vmatprep.subr.bf16.mxu0 0
        %1385 = vmatpush1.bf16.msra.mxu0 0
        %1386 = vmatprep.subr.bf16.mxu0 0
        %1387 = vmatpush1.bf16.msra.mxu0 0
        %1388 = vmatprep.subr.bf16.mxu0 0
        %1389 = vmatpush1.bf16.msra.mxu0 0
        %1390 = vmatprep.subr.bf16.mxu0 0
        %1391 = vmatpush1.bf16.msra.mxu0 0
        %1392 = vmatprep.subr.bf16.mxu0 0
        %1393 = vmatpush1.bf16.msra.mxu0 0
        %1394 = vmatprep.subr.bf16.mxu0 0
        %1395 = vmatpush1.bf16.msra.mxu0 0
        %1396 = vmatprep.subr.bf16.mxu0 0
        %1397 = vmatpush1.bf16.msra.mxu0 0
        %1398 = vmatprep.subr.bf16.mxu0 0
        %1399 = vmatpush1.bf16.msra.mxu0 0
        %1400 = vmatprep.subr.bf16.mxu0 0
        %1401 = vmatpush1.bf16.msra.mxu0 0
        %1402 = vmatprep.subr.bf16.mxu0 0
        %1403 = vmatpush1.bf16.msra.mxu0 0
        %1404 = vmatprep.mubr.bf16.mxu0 0
        %1405 = vmatmul.mubr.bf16.gmra.mrb[0].mxu0 %v1366
        %v1406 = vpop.f32.mrb[0].mxu0
        %v1407 = vadd.f32 0.0, %v1406
        %v1408 = vpop.f32.mrb[0].mxu0
        %v1409 = vpop.f32.mrb[0].mxu0
        %v1410 = vpop.f32.mrb[0].mxu0
        %1411 = vdwg.mxu0
        %v1413 = vsel %vm1120, %v1362, 0
        %v1416 = vsel %vm1368, %v1112, 0
        %1418 = vmatprep.subr.bf16.mxu0 0
        %1419 = vmatpush1.bf16.msra.mxu0 %v1416
        %1420 = vmatprep.subr.bf16.mxu0 0
        %1421 = vmatpush1.bf16.msra.mxu0 0
        %1422 = vmatprep.subr.bf16.mxu0 0
        %1423 = vmatpush1.bf16.msra.mxu0 0
        %1424 = vmatprep.subr.bf16.mxu0 0
        %1425 = vmatpush1.bf16.msra.mxu0 0
        %1426 = vmatprep.subr.bf16.mxu0 0
        %1427 = vmatpush1.bf16.msra.mxu0 0
        %1428 = vmatprep.subr.bf16.mxu0 0
        %1429 = vmatpush1.bf16.msra.mxu0 0
        %1430 = vmatprep.subr.bf16.mxu0 0
        %1431 = vmatpush1.bf16.msra.mxu0 0
        %1432 = vmatprep.subr.bf16.mxu0 0
        %1433 = vmatpush1.bf16.msra.mxu0 0
        %1434 = vmatprep.subr.bf16.mxu0 0
        %1435 = vmatpush1.bf16.msra.mxu0 0
        %1436 = vmatprep.subr.bf16.mxu0 0
        %1437 = vmatpush1.bf16.msra.mxu0 0
        %1438 = vmatprep.subr.bf16.mxu0 0
        %1439 = vmatpush1.bf16.msra.mxu0 0
        %1440 = vmatprep.subr.bf16.mxu0 0
        %1441 = vmatpush1.bf16.msra.mxu0 0
        %1442 = vmatprep.subr.bf16.mxu0 0
        %1443 = vmatpush1.bf16.msra.mxu0 0
        %1444 = vmatprep.subr.bf16.mxu0 0
        %1445 = vmatpush1.bf16.msra.mxu0 0
        %1446 = vmatprep.subr.bf16.mxu0 0
        %1447 = vmatpush1.bf16.msra.mxu0 0
        %1448 = vmatprep.subr.bf16.mxu0 0
        %1449 = vmatpush1.bf16.msra.mxu0 0
        %1450 = vmatprep.mubr.bf16.mxu0 0
        %1451 = vmatmul.mubr.bf16.gmra.mrb[0].mxu0 %v1413
        %v1452 = vpop.f32.mrb[0].mxu0
        %v1453 = vadd.f32 0.0, %v1452
        %v1454 = vpop.f32.mrb[0].mxu0
        %v1455 = vpop.f32.mrb[0].mxu0
        %v1456 = vpop.f32.mrb[0].mxu0
        %1457 = vdwg.mxu0
        %v1459 = vsel %vm1120, %v1363, 0
        %v1462 = vsel %vm1368, %v1114, 0
        %1464 = vmatprep.subr.bf16.mxu0 0
        %1465 = vmatpush1.bf16.msra.mxu0 %v1462
        %1466 = vmatprep.subr.bf16.mxu0 0
        %1467 = vmatpush1.bf16.msra.mxu0 0
        %1468 = vmatprep.subr.bf16.mxu0 0
        %1469 = vmatpush1.bf16.msra.mxu0 0
        %1470 = vmatprep.subr.bf16.mxu0 0
        %1471 = vmatpush1.bf16.msra.mxu0 0
        %1472 = vmatprep.subr.bf16.mxu0 0
        %1473 = vmatpush1.bf16.msra.mxu0 0
        %1474 = vmatprep.subr.bf16.mxu0 0
        %1475 = vmatpush1.bf16.msra.mxu0 0
        %1476 = vmatprep.subr.bf16.mxu0 0
        %1477 = vmatpush1.bf16.msra.mxu0 0
        %1478 = vmatprep.subr.bf16.mxu0 0
        %1479 = vmatpush1.bf16.msra.mxu0 0
        %1480 = vmatprep.subr.bf16.mxu0 0
        %1481 = vmatpush1.bf16.msra.mxu0 0
        %1482 = vmatprep.subr.bf16.mxu0 0
        %1483 = vmatpush1.bf16.msra.mxu0 0
        %1484 = vmatprep.subr.bf16.mxu0 0
        %1485 = vmatpush1.bf16.msra.mxu0 0
        %1486 = vmatprep.subr.bf16.mxu0 0
        %1487 = vmatpush1.bf16.msra.mxu0 0
        %1488 = vmatprep.subr.bf16.mxu0 0
        %1489 = vmatpush1.bf16.msra.mxu0 0
        %1490 = vmatprep.subr.bf16.mxu0 0
        %1491 = vmatpush1.bf16.msra.mxu0 0
        %1492 = vmatprep.subr.bf16.mxu0 0
        %1493 = vmatpush1.bf16.msra.mxu0 0
        %1494 = vmatprep.subr.bf16.mxu0 0
        %1495 = vmatpush1.bf16.msra.mxu0 0
        %1496 = vmatprep.mubr.bf16.mxu0 0
        %1497 = vmatmul.mubr.bf16.gmra.mrb[0].mxu0 %v1459
        %v1498 = vpop.f32.mrb[0].mxu0
        %v1499 = vadd.f32 0.0, %v1498
        %v1500 = vpop.f32.mrb[0].mxu0
        %v1501 = vpop.f32.mrb[0].mxu0
        %v1502 = vpop.f32.mrb[0].mxu0
        %1503 = vdwg.mxu0
        %v1505 = vsel %vm1120, %v1364, 0
        %v1508 = vsel %vm1368, %v1116, 0
        %1510 = vmatprep.subr.bf16.mxu0 0
        %1511 = vmatpush1.bf16.msra.mxu0 %v1508
        %1512 = vmatprep.subr.bf16.mxu0 0
        %1513 = vmatpush1.bf16.msra.mxu0 0
        %1514 = vmatprep.subr.bf16.mxu0 0
        %1515 = vmatpush1.bf16.msra.mxu0 0
        %1516 = vmatprep.subr.bf16.mxu0 0
        %1517 = vmatpush1.bf16.msra.mxu0 0
        %1518 = vmatprep.subr.bf16.mxu0 0
        %1519 = vmatpush1.bf16.msra.mxu0 0
        %1520 = vmatprep.subr.bf16.mxu0 0
        %1521 = vmatpush1.bf16.msra.mxu0 0
        %1522 = vmatprep.subr.bf16.mxu0 0
        %1523 = vmatpush1.bf16.msra.mxu0 0
        %1524 = vmatprep.subr.bf16.mxu0 0
        %1525 = vmatpush1.bf16.msra.mxu0 0
        %1526 = vmatprep.subr.bf16.mxu0 0
        %1527 = vmatpush1.bf16.msra.mxu0 0
        %1528 = vmatprep.subr.bf16.mxu0 0
        %1529 = vmatpush1.bf16.msra.mxu0 0
        %1530 = vmatprep.subr.bf16.mxu0 0
        %1531 = vmatpush1.bf16.msra.mxu0 0
        %1532 = vmatprep.subr.bf16.mxu0 0
        %1533 = vmatpush1.bf16.msra.mxu0 0
        %1534 = vmatprep.subr.bf16.mxu0 0
        %1535 = vmatpush1.bf16.msra.mxu0 0
        %1536 = vmatprep.subr.bf16.mxu0 0
        %1537 = vmatpush1.bf16.msra.mxu0 0
        %1538 = vmatprep.subr.bf16.mxu0 0
        %1539 = vmatpush1.bf16.msra.mxu0 0
        %1540 = vmatprep.subr.bf16.mxu0 0
        %1541 = vmatpush1.bf16.msra.mxu0 0
        %1542 = vmatprep.mubr.bf16.mxu0 0
        %1543 = vmatmul.mubr.bf16.gmra.mrb[0].mxu0 %v1505
        %v1544 = vpop.f32.mrb[0].mxu0
        %v1545 = vadd.f32 0.0, %v1544
        %v1546 = vpop.f32.mrb[0].mxu0
        %v1547 = vpop.f32.mrb[0].mxu0
        %v1548 = vpop.f32.mrb[0].mxu0
        %1549 = vdwg.mxu0
        %1551 = vrot.lane.b32.xlu0 %v1453, 8
        %v1552 = vpop.permute.xlu0 %1551
        %1555 = vrot.lane.b32.xlu0 %v1499, 16
        %v1556 = vpop.permute.xlu0 %1555
        %1559 = vrot.lane.b32.xlu0 %v1545, 24
        %v1560 = vpop.permute.xlu0 %1559
        %v1562 = vsel %vm1120, %v1407, %v1552
        %vm1563 = vcmask 130048
        %v1564 = vsel %vm1563, %v1562, %v1556
        %vm1565 = vcmask 195584
        %v1566 = vsel %vm1565, %v1564, %v1560
        %v1567 = vpack.c.bf16 %v1566, %v1566
        %v1568 = vld [vmem:[#allocation16] sm:$0xf]
        %v1569 = vld [vmem:[#allocation16 + $0x4] sm:$0xf]
        %v1570 = vld [vmem:[#allocation16 + $0x8] sm:$0xf]
        %v1571 = vld [vmem:[#allocation16 + $0xc] sm:$0xf]
        %v1572 = vld [vmem:[#allocation17] sm:$0x1]
        %v1574 = vlaneseq
        %v1575 = vshrl.u32 %v1574, 7
        %v1576 = vsub.s32 0, %v1575
        %v1577 = vrot.slane %v1572, %v1576
        %v1583 = vunpack.c.l.b16 %v1568
        %v1584 = vunpack.c.l.b16 %v1569
        %v1585 = vunpack.c.l.b16 %v1570
        %v1586 = vunpack.c.l.b16 %v1571
        %v1587 = vpack.c.b16 %v1584, %v1583
        %v1588 = vpack.c.b16 %v1586, %v1585
        %v1592 = vsel %vm923, %v1567, 0
        %1594 = vmatprep.subr.bf16.mxu0 0
        %1595 = vmatpush1.bf16.msra.mxu0 %v1587
        %1596 = vmatprep.subr.bf16.mxu0 0
        %1597 = vmatpush1.bf16.msra.mxu0 %v1588
        %1598 = vmatprep.subr.bf16.mxu0 0
        %1599 = vmatpush1.bf16.msra.mxu0 0
        %1600 = vmatprep.subr.bf16.mxu0 0
        %1601 = vmatpush1.bf16.msra.mxu0 0
        %1602 = vmatprep.subr.bf16.mxu0 0
        %1603 = vmatpush1.bf16.msra.mxu0 0
        %1604 = vmatprep.subr.bf16.mxu0 0
        %1605 = vmatpush1.bf16.msra.mxu0 0
        %1606 = vmatprep.subr.bf16.mxu0 0
        %1607 = vmatpush1.bf16.msra.mxu0 0
        %1608 = vmatprep.subr.bf16.mxu0 0
        %1609 = vmatpush1.bf16.msra.mxu0 0
        %1610 = vmatprep.subr.bf16.mxu0 0
        %1611 = vmatpush1.bf16.msra.mxu0 0
        %1612 = vmatprep.subr.bf16.mxu0 0
        %1613 = vmatpush1.bf16.msra.mxu0 0
        %1614 = vmatprep.subr.bf16.mxu0 0
        %1615 = vmatpush1.bf16.msra.mxu0 0
        %1616 = vmatprep.subr.bf16.mxu0 0
        %1617 = vmatpush1.bf16.msra.mxu0 0
        %1618 = vmatprep.subr.bf16.mxu0 0
        %1619 = vmatpush1.bf16.msra.mxu0 0
        %1620 = vmatprep.subr.bf16.mxu0 0
        %1621 = vmatpush1.bf16.msra.mxu0 0
        %1622 = vmatprep.subr.bf16.mxu0 0
        %1623 = vmatpush1.bf16.msra.mxu0 0
        %1624 = vmatprep.subr.bf16.mxu0 0
        %1625 = vmatpush1.bf16.msra.mxu0 0
        %1626 = vmatprep.mubr.bf16.mxu0 0
        %1627 = vmatmul.mubr.bf16.gmra.mrb[0].mxu0 %v1592
        %v1628 = vpop.f32.mrb[0].mxu0
        %v1629 = vadd.f32 %v1577, %v1628
        %v1630 = vpop.f32.mrb[0].mxu0
        %v1631 = vpop.f32.mrb[0].mxu0
        %v1632 = vpop.f32.mrb[0].mxu0
        %1633 = vdwg.mxu0
        %v1634 = vld [vmem:[#allocation19] sm:$0x1]
        %v1635 = vld [vmem:[#allocation20] sm:$0x1]
        %v1636 = vsel %vm923, %v1629, 0.0
        %1637 = vadd.xlane.f32.xlu0 %v1636
        %v1638 = vpop.xlane.xlu0 %1637
        %v1639 = vrcp.pop 32.0
        %v1640 = vmul.f32 %v1638, %v1639
        %v1641 = vsub.f32 %v1629, %v1640
        %v1642 = vmul.f32 %v1641, %v1641
        %v1643 = vsel %vm923, %v1642, 0.0
        %1644 = vadd.xlane.f32.xlu0 %v1643
        %v1645 = vpop.xlane.xlu0 %1644
        %v1646 = vmul.f32 %v1645, 0.032258064
        %v1647 = vrsqrt.pop %v1646
        %v1648 = vmul.f32 %v1646, %v1647
        %vm1649 = vcmp.eq.f32.partialorder %v1646, inf
        %v1650 = vsel %vm1649, %v1646, %v1648
        %vm1651 = vcmp.eq.f32.partialorder %v1646, 0.0
        %v1652 = vand.u32 %v1646, 2147483648
        %v1653 = vsel %vm1651, %v1652, %v1650
        %v1654 = vadd.f32 %v1653, 1e-06
        %v1655 = vrcp.pop %v1654
        %v1656 = vmul.f32 %v1641, %v1655
        %v1658 = vlaneseq
        %v1659 = vshrl.u32 %v1658, 7
        %v1660 = vsub.s32 0, %v1659
        %v1661 = vrot.slane %v1634, %v1660
        %v1663 = vmul.f32 %v1661, %v1656
        %v1665 = vlaneseq
        %v1666 = vshrl.u32 %v1665, 7
        %v1667 = vsub.s32 0, %v1666
        %v1668 = vrot.slane %v1635, %v1667
        %v1670 = vadd.f32 %v1663, %v1668
        %v1671 = vadd.f32 %v1629, %v1670
        %v1672 = vld [vmem:[#allocation22] sm:$0x1]
        %v1673 = vld [vmem:[#allocation23] sm:$0x1]
        %v1674 = vsel %vm923, %v1671, 0.0
        %1675 = vadd.xlane.f32.xlu0 %v1674
        %v1676 = vpop.xlane.xlu0 %1675
        %v1677 = vmul.f32 %v1676, %v1639
        %v1678 = vsub.f32 %v1671, %v1677
        %v1679 = vmul.f32 %v1678, %v1678
        %v1680 = vsel %vm923, %v1679, 0.0
        %1681 = vadd.xlane.f32.xlu0 %v1680
        %v1682 = vpop.xlane.xlu0 %1681
        %v1683 = vmul.f32 %v1682, 0.032258064
        %v1684 = vrsqrt.pop %v1683
        %v1685 = vmul.f32 %v1683, %v1684
        %vm1686 = vcmp.eq.f32.partialorder %v1683, inf
        %v1687 = vsel %vm1686, %v1683, %v1685
        %vm1688 = vcmp.eq.f32.partialorder %v1683, 0.0
        %v1689 = vand.u32 %v1683, 2147483648
        %v1690 = vsel %vm1688, %v1689, %v1687
        %v1691 = vadd.f32 %v1690, 1e-06
        %v1692 = vrcp.pop %v1691
        %v1693 = vmul.f32 %v1678, %v1692
        %v1695 = vlaneseq
        %v1696 = vshrl.u32 %v1695, 7
        %v1697 = vsub.s32 0, %v1696
        %v1698 = vrot.slane %v1672, %v1697
        %v1700 = vmul.f32 %v1698, %v1693
        %v1702 = vlaneseq
        %v1703 = vshrl.u32 %v1702, 7
        %v1704 = vsub.s32 0, %v1703
        %v1705 = vrot.slane %v1673, %v1704
        %v1707 = vadd.f32 %v1700, %v1705
        %v1708 = vpack.c.bf16 %v1707, %v1707
        %v1709 = vld [vmem:[#allocation25] sm:$0xf]
        %v1710 = vld [vmem:[#allocation25 + $0x4] sm:$0xf]
        %v1711 = vld [vmem:[#allocation25 + $0x8] sm:$0xf]
        %v1712 = vld [vmem:[#allocation25 + $0xc] sm:$0xf]
        %v1713 = vld [vmem:[#allocation26] sm:$0x1]
        %v1715 = vlaneseq
        %v1716 = vshrl.u32 %v1715, 7
        %v1717 = vsub.s32 0, %v1716
        %v1718 = vrot.slane %v1713, %v1717
        %v1724 = vunpack.c.l.b16 %v1709
        %v1725 = vunpack.c.l.b16 %v1710
        %v1726 = vunpack.c.l.b16 %v1711
        %v1727 = vunpack.c.l.b16 %v1712
        %v1728 = vpack.c.b16 %v1725, %v1724
        %v1729 = vpack.c.b16 %v1727, %v1726
        %v1733 = vsel %vm923, %v1708, 0
        %1735 = vmatprep.subr.bf16.mxu0 0
        %1736 = vmatpush1.bf16.msra.mxu0 %v1728
        %1737 = vmatprep.subr.bf16.mxu0 0
        %1738 = vmatpush1.bf16.msra.mxu0 %v1729
        %1739 = vmatprep.subr.bf16.mxu0 0
        %1740 = vmatpush1.bf16.msra.mxu0 0
        %1741 = vmatprep.subr.bf16.mxu0 0
        %1742 = vmatpush1.bf16.msra.mxu0 0
        %1743 = vmatprep.subr.bf16.mxu0 0
        %1744 = vmatpush1.bf16.msra.mxu0 0
        %1745 = vmatprep.subr.bf16.mxu0 0
        %1746 = vmatpush1.bf16.msra.mxu0 0
        %1747 = vmatprep.subr.bf16.mxu0 0
        %1748 = vmatpush1.bf16.msra.mxu0 0
        %1749 = vmatprep.subr.bf16.mxu0 0
        %1750 = vmatpush1.bf16.msra.mxu0 0
        %1751 = vmatprep.subr.bf16.mxu0 0
        %1752 = vmatpush1.bf16.msra.mxu0 0
        %1753 = vmatprep.subr.bf16.mxu0 0
        %1754 = vmatpush1.bf16.msra.mxu0 0
        %1755 = vmatprep.subr.bf16.mxu0 0
        %1756 = vmatpush1.bf16.msra.mxu0 0
        %1757 = vmatprep.subr.bf16.mxu0 0
        %1758 = vmatpush1.bf16.msra.mxu0 0
        %1759 = vmatprep.subr.bf16.mxu0 0
        %1760 = vmatpush1.bf16.msra.mxu0 0
        %1761 = vmatprep.subr.bf16.mxu0 0
        %1762 = vmatpush1.bf16.msra.mxu0 0
        %1763 = vmatprep.subr.bf16.mxu0 0
        %1764 = vmatpush1.bf16.msra.mxu0 0
        %1765 = vmatprep.subr.bf16.mxu0 0
        %1766 = vmatpush1.bf16.msra.mxu0 0
        %1767 = vmatprep.mubr.bf16.mxu0 0
        %1768 = vmatmul.mubr.bf16.gmra.mrb[0].mxu0 %v1733
        %v1769 = vpop.f32.mrb[0].mxu0
        %v1770 = vadd.f32 %v1718, %v1769
        %v1771 = vpop.f32.mrb[0].mxu0
        %v1772 = vpop.f32.mrb[0].mxu0
        %v1773 = vpop.f32.mrb[0].mxu0
        %1774 = vdwg.mxu0
        %v1775 = vmul.f32 %v1770, 0.5
        %v1776 = vmul.f32 %v1770, %v1770
        %v1777 = vmul.f32 %v1770, %v1776
        %v1778 = vmul.f32 %v1777, 0.044715
        %v1779 = vadd.f32 %v1770, %v1778
        %v1780 = vmul.f32 %v1779, 0.7978846
        %v1781 = vtanh.pop %v1780
        %v1782 = vadd.f32 %v1781, 1.0
        %v1783 = vmul.f32 %v1775, %v1782
        %v1784 = vpack.c.bf16 %v1783, %v1783
        %v1785 = vld [vmem:[#allocation28] sm:$0xf]
        %v1786 = vld [vmem:[#allocation28 + $0x4] sm:$0xf]
        %v1787 = vld [vmem:[#allocation28 + $0x8] sm:$0xf]
        %v1788 = vld [vmem:[#allocation28 + $0xc] sm:$0xf]
        %v1789 = vld [vmem:[#allocation28 + $0x10] sm:$0xf]
        %v1790 = vld [vmem:[#allocation28 + $0x14] sm:$0xf]
        %v1791 = vld [vmem:[#allocation28 + $0x18] sm:$0xf]
        %v1792 = vld [vmem:[#allocation28 + $0x1c] sm:$0xf]
        %v1793 = vld [vmem:[#allocation28 + $0x20] sm:$0xf]
        %v1794 = vld [vmem:[#allocation28 + $0x24] sm:$0xf]
        %v1795 = vld [vmem:[#allocation28 + $0x28] sm:$0xf]
        %v1796 = vld [vmem:[#allocation28 + $0x2c] sm:$0xf]
        %v1797 = vld [vmem:[#allocation28 + $0x30] sm:$0xf]
        %v1798 = vld [vmem:[#allocation28 + $0x34] sm:$0xf]
        %v1799 = vld [vmem:[#allocation28 + $0x38] sm:$0xf]
        %v1800 = vld [vmem:[#allocation28 + $0x3c] sm:$0xf]
        %v1801 = vld [vmem:[#allocation29] sm:$0x1]
        %v1803 = vlaneseq
        %v1804 = vshrl.u32 %v1803, 7
        %v1805 = vsub.s32 0, %v1804
        %v1806 = vrot.slane %v1801, %v1805
        %v1824 = vunpack.c.l.b16 %v1785
        %v1825 = vunpack.c.l.b16 %v1786
        %v1826 = vunpack.c.l.b16 %v1787
        %v1827 = vunpack.c.l.b16 %v1788
        %v1828 = vunpack.c.l.b16 %v1789
        %v1829 = vunpack.c.l.b16 %v1790
        %v1830 = vunpack.c.l.b16 %v1791
        %v1831 = vunpack.c.l.b16 %v1792
        %v1832 = vunpack.c.l.b16 %v1793
        %v1833 = vunpack.c.l.b16 %v1794
        %v1834 = vunpack.c.l.b16 %v1795
        %v1835 = vunpack.c.l.b16 %v1796
        %v1836 = vunpack.c.l.b16 %v1797
        %v1837 = vunpack.c.l.b16 %v1798
        %v1838 = vunpack.c.l.b16 %v1799
        %v1839 = vunpack.c.l.b16 %v1800
        %v1840 = vpack.c.b16 %v1825, %v1824
        %v1841 = vpack.c.b16 %v1827, %v1826
        %v1842 = vpack.c.b16 %v1829, %v1828
        %v1843 = vpack.c.b16 %v1831, %v1830
        %v1844 = vpack.c.b16 %v1833, %v1832
        %v1845 = vpack.c.b16 %v1835, %v1834
        %v1846 = vpack.c.b16 %v1837, %v1836
        %v1847 = vpack.c.b16 %v1839, %v1838
        %1856 = vmatprep.subr.bf16.mxu0 0
        %1857 = vmatpush1.bf16.msra.mxu0 %v1840
        %1858 = vmatprep.subr.bf16.mxu0 0
        %1859 = vmatpush1.bf16.msra.mxu0 %v1841
        %1860 = vmatprep.subr.bf16.mxu0 0
        %1861 = vmatpush1.bf16.msra.mxu0 %v1842
        %1862 = vmatprep.subr.bf16.mxu0 0
        %1863 = vmatpush1.bf16.msra.mxu0 %v1843
        %1864 = vmatprep.subr.bf16.mxu0 0
        %1865 = vmatpush1.bf16.msra.mxu0 %v1844
        %1866 = vmatprep.subr.bf16.mxu0 0
        %1867 = vmatpush1.bf16.msra.mxu0 %v1845
        %1868 = vmatprep.subr.bf16.mxu0 0
        %1869 = vmatpush1.bf16.msra.mxu0 %v1846
        %1870 = vmatprep.subr.bf16.mxu0 0
        %1871 = vmatpush1.bf16.msra.mxu0 %v1847
        %1872 = vmatprep.subr.bf16.mxu0 0
        %1873 = vmatpush1.bf16.msra.mxu0 0
        %1874 = vmatprep.subr.bf16.mxu0 0
        %1875 = vmatpush1.bf16.msra.mxu0 0
        %1876 = vmatprep.subr.bf16.mxu0 0
        %1877 = vmatpush1.bf16.msra.mxu0 0
        %1878 = vmatprep.subr.bf16.mxu0 0
        %1879 = vmatpush1.bf16.msra.mxu0 0
        %1880 = vmatprep.subr.bf16.mxu0 0
        %1881 = vmatpush1.bf16.msra.mxu0 0
        %1882 = vmatprep.subr.bf16.mxu0 0
        %1883 = vmatpush1.bf16.msra.mxu0 0
        %1884 = vmatprep.subr.bf16.mxu0 0
        %1885 = vmatpush1.bf16.msra.mxu0 0
        %1886 = vmatprep.subr.bf16.mxu0 0
        %1887 = vmatpush1.bf16.msra.mxu0 0
        %1888 = vmatprep.mubr.bf16.mxu0 0
        %1889 = vmatmul.mubr.bf16.gmra.mrb[0].mxu0 %v1784
        %v1890 = vpop.f32.mrb[0].mxu0
        %v1891 = vadd.f32 %v1806, %v1890
        %v1892 = vpop.f32.mrb[0].mxu0
        %v1893 = vpop.f32.mrb[0].mxu0
        %v1894 = vpop.f32.mrb[0].mxu0
        %1895 = vdwg.mxu0
        %v1896 = vadd.f32 %v1671, %v1891
        %1897 = vst.msk [vmem:[%s889] sm:$0xff] %vm923, %v1896
        %s1898 = sand.u32 %s463, 1
        %s1899 = scalar_lea.sflag [#allocation4], %s1898
        %s1900 = sand.u32 %s463, 1
        %s1901 = smul.addr %s1900, 8
        %s1902 = scalar_lea.vmem [#allocation31], %s1901
        %s1903 = sand.u32 %s491, 1
        %s1904 = scalar_lea.sflag [#allocation33], %s1903
        %s1905 = sand.u32 %s491, 1
        %s1906 = smul.addr %s1905, 32
        %s1907 = scalar_lea.vmem [#allocation32], %s1906
        // Predicated region
        $region165: #{tpu_custom_call.1} parent=91 // pred_check
          %p1908 = pneg %p473
        $region166: #{tpu_custom_call.1} parent=91 // pred_check_branch
          %1910 = sbr.rel (%p1908) target = $region168
        $region167: #{tpu_custom_call.1} parent=91 // pred_region
          %s1912 = ssub.s32 128, 128
          %1913 = vsyncadd %s1899, %s1912
          %s1914 = sadd.s32 %s56, %s55
          %s1915 = smul.addr %s1914, 128
          %s1916 = scalar_lea.hbm %s18, %s1915
          %s1918 = sshll.u32 %s1902, 4
          %s1919 = int_to_ptr.vmem [resolvable:$true] %s1918
          %1921 = dma.vmem_to_hbm [thread:$0]  %s1919, 128, %s1916, %s1899
        $region168: #{tpu_custom_call.1} parent=91 // pred_fallthru
          _
        // Predicated region
        $region169: #{tpu_custom_call.1} parent=91 // pred_check
          %p1922 = pneg %p501
        $region170: #{tpu_custom_call.1} parent=91 // pred_check_branch
          %1924 = sbr.rel (%p1922) target = $region172
        $region171: #{tpu_custom_call.1} parent=91 // pred_region
          %s1926 = ssub.s32 512, 512
          %1927 = vsyncadd %s1904, %s1926
          %s1928 = smul.addr %s55, 4
          %s1929 = sadd.s32 %s56, %s1928
          %s1930 = smul.addr %s1929, 128
          %s1931 = scalar_lea.hbm %s19, %s1930
          %s1932 = sshll.u32 %s1907, 4
          %s1933 = int_to_ptr.vmem [resolvable:$true] %s1932
          %1938 = dma.vmem_to_hbm [thread:$0]  %s1933, 512, %s1931, %s1904, 128, 128, 8
        $region172: #{tpu_custom_call.1} parent=91 // pred_fallthru
          _
      $region92: #{tpu_custom_call.1} parent=5 // pred_fallthru
        _
      %p1939 = scmp.le.s32.totalorder 2, %s46
      // Predicated region
      $region173: #{tpu_custom_call.1} parent=5 // pred_check
        %p1940 = pneg %p1939
      $region174: #{tpu_custom_call.1} parent=5 // pred_check_branch
        %1942 = sbr.rel (%p1940) target = $region176
      $region175: #{tpu_custom_call.1} parent=5 // pred_region
        %s1943 = ssub.s32 %s46, 2
        // Predicated region
        $region177: #{tpu_custom_call.1} parent=175 // pred_check
          %p1944 = pneg %p479
        $region178: #{tpu_custom_call.1} parent=175 // pred_check_branch
          %1946 = sbr.rel (%p1944) target = $region180
        $region179: #{tpu_custom_call.1} parent=175 // pred_region
          %s1947 = sand.u32 %s464, 1
          %s1948 = scalar_lea.sflag [#allocation4], %s1947
          %s1949 = sand.u32 %s464, 1
          %s1950 = smul.addr %s1949, 8
          %s1951 = scalar_lea.vmem [#allocation31], %s1950
          %1952 = dma.done %s1948, 128
        $region180: #{tpu_custom_call.1} parent=175 // pred_fallthru
          _
        // Predicated region
        $region181: #{tpu_custom_call.1} parent=175 // pred_check
          %p1953 = pneg %p507
        $region182: #{tpu_custom_call.1} parent=175 // pred_check_branch
          %1955 = sbr.rel (%p1953) target = $region184
        $region183: #{tpu_custom_call.1} parent=175 // pred_region
          %s1956 = sand.u32 %s492, 1
          %s1957 = scalar_lea.sflag [#allocation33], %s1956
          %s1958 = sand.u32 %s492, 1
          %s1959 = smul.addr %s1958, 32
          %s1960 = scalar_lea.vmem [#allocation32], %s1959
          %1961 = dma.done %s1957, 512
        $region184: #{tpu_custom_call.1} parent=175 // pred_fallthru
          _
      $region176: #{tpu_custom_call.1} parent=5 // pred_fallthru
        _
    $region6: #{tpu_custom_call.1} parent=1 // loop_footer
      %s50 = sadd.s32 1, %s46
    $region7: #{tpu_custom_call.1} parent=1 // loop_footer_branch
      %45 = sbr.rel target = $region3
    $region8: #{tpu_custom_call.1} parent=1 // loop_exit
      _
    %1962 = vsyncpa [#allocation3], 1
    %s1963 = scalar_lea.sflag [#allocation3], 1
    %1964 = vsyncpa %s1963, 1
    %1965 = vsyncpa [#allocation6], 1
    %s1966 = scalar_lea.sflag [#allocation6], 1
    %1967 = vsyncpa %s1966, 1
    %1968 = vsyncpa [#allocation9], 1
    %1969 = vsyncpa [#allocation12], 1
    %1970 = vsyncpa [#allocation15], 1
    %1971 = vsyncpa [#allocation18], 1
    %1972 = vsyncpa [#allocation21], 1
    %1973 = vsyncpa [#allocation24], 1
    %1974 = vsyncpa [#allocation27], 1
    %1975 = vsyncpa [#allocation30], 1
    %1976 = vsyncpa [#allocation4], 1
    %s1977 = scalar_lea.sflag [#allocation4], 1
    %1978 = vsyncpa %s1977, 1
    %1979 = vsyncpa [#allocation33], 1
    %s1980 = scalar_lea.sflag [#allocation33], 1
    %1981 = vsyncpa %s1980, 1

</llo_original>
